<compile_context>
chip_gen: v5e
topology: v5e:2x2
jax: 0.10.0
libtpu: 0.0.40
codegen_flags: <defaults>
</compile_context>

<pallas_src>
import numpy as np
import jax
import jax.numpy as jnp
from jax.experimental import pallas as pl
from jax.experimental.pallas import tpu as pltpu

_XLA_HIGHEST = jax.lax.Precision.HIGHEST  # init-time / reference XLA code only


def _out_hw(h, w):
    """Output spatial dims of a 3x3 / stride-2 / pad-1 conv."""
    return (h + 2 - 3) // 2 + 1, (w + 2 - 3) // 2 + 1


# --------------------------------------------------------------------------- #
# Fused kernel: one batch sample per grid step, all three stages on-chip.
# --------------------------------------------------------------------------- #
def _fused_teacher_kernel(lhs1_ref, w1_ref, b1_ref,
                          g2_ref, wt2_ref, b2_ref,
                          g3_ref, wt3_ref, b3_ref,
                          o1_ref, o2_ref, o3_ref):
    f32 = jnp.float32
    bf16 = jnp.bfloat16

    # ---- Stage 1: im2col GEMM (patches pre-extracted in the wrapper) --------
    h1 = jnp.dot(lhs1_ref[...], w1_ref[...], preferred_element_type=f32)
    h1 = jnp.maximum(h1 + b1_ref[...], 0.0)                   # (P1, C1) f32
    o1_ref[...] = h1.astype(o1_ref.dtype)
    h1b = h1.astype(bf16)

    # ---- Stage 2: per-tap 0/1 spatial gather + channel mix, f32 accumulate --
    acc2 = jnp.zeros(o2_ref.shape, f32)
    for k in range(g2_ref.shape[0]):                          # 9 taps, unrolled
        gathered = jnp.dot(g2_ref[k], h1b, preferred_element_type=f32)
        # gather matrix is 0/1 -> cast back to bf16 is exact
        acc2 = acc2 + jnp.dot(gathered.astype(bf16), wt2_ref[k],
                              preferred_element_type=f32)
    h2 = jnp.maximum(acc2 + b2_ref[...], 0.0)                  # (P2, C2) f32
    o2_ref[...] = h2.astype(o2_ref.dtype)
    h2b = h2.astype(bf16)

    # ---- Stage 3 -------------------------------------------------------------
    acc3 = jnp.zeros(o3_ref.shape, f32)
    for k in range(g3_ref.shape[0]):
        gathered = jnp.dot(g3_ref[k], h2b, preferred_element_type=f32)
        acc3 = acc3 + jnp.dot(gathered.astype(bf16), wt3_ref[k],
                              preferred_element_type=f32)
    o3_ref[...] = jnp.maximum(acc3 + b3_ref[...], 0.0).astype(o3_ref.dtype)


# --------------------------------------------------------------------------- #
# Plain-XLA reference conv (init-time cross-check only; never in the kernel).
# --------------------------------------------------------------------------- #
def _conv3x3_s2_nchw_ref(x, w, b=None):
    batch, cin, h, wsp = x.shape
    cout = w.shape[0]
    ho, wo = _out_hw(h, wsp)
    xp = jnp.pad(x, ((0, 0), (0, 0), (1, 1), (1, 1)))
    out = jnp.zeros((batch, cout, ho, wo), jnp.float32)
    for kh in range(3):
        for kw in range(3):
            patch = jax.lax.slice(
                xp, (0, 0, kh, kw),
                (batch, cin, kh + 2 * (ho - 1) + 1, kw + 2 * (wo - 1) + 1),
                (1, 1, 2, 2))                                  # (B, Cin, Ho, Wo)
            out = out + jnp.einsum('bchw,oc->bohw', patch, w[:, :, kh, kw],
                                   precision=_XLA_HIGHEST)
    if b is not None:
        out = out + b.reshape(1, cout, 1, 1)
    return out


def init_teacher_params(key, cin=4, widths=(8, 16, 32)):
    """Deterministic synthetic encoder weights (He-style init)."""
    params = []
    c_prev = cin
    for c in widths:
        key, k_w, k_b = jax.random.split(key, 3)
        fan_in = c_prev * 9
        w = jax.random.normal(k_w, (c, c_prev, 3, 3), jnp.float32) * (2.0 / fan_in) ** 0.5
        b = jax.random.normal(k_b, (c,), jnp.float32) * 0.01
        params.append((w, b))
        c_prev = c
    return params


def _gather_mats_np(h, w):
    """0/1 matrices g[k, out_pos, in_pos] selecting the tap-k input row for each
    stride-2 / pad-1 output position (zero row where the tap falls on padding)."""
    ho, wo = _out_hw(h, w)
    g = np.zeros((9, ho * wo, h * w), np.float32)
    for kh in range(3):
        for kw in range(3):
            k = kh * 3 + kw
            for ph in range(ho):
                hi = 2 * ph + kh - 1
                if not (0 <= hi < h):
                    continue
                for pw in range(wo):
                    wi = 2 * pw + kw - 1
                    if not (0 <= wi < w):
                        continue
                    g[k, ph * wo + pw, hi * w + wi] = 1.0
    return g, ho, wo


def pack_teacher_params(raw_params, cin, hw):
    """Hoisted weight repack (init time, once per config).

    Stage 1 becomes a flattened im2col weight (Cin*9, C1); stages 2/3 become
    per-tap (9, Ho*Wo, H*W) 0/1 gather matrices + (9, Cin, Cout) channel-mix
    weights.  Everything matmul-heavy is stored in bf16 (gather matrices are
    exact in bf16); biases stay f32 for the f32 accumulation path.
    """
    h, w = hw
    packed = {}

    # Stage 1: im2col GEMM weight, column order (kh, kw, ci) -> matches wrapper.
    wc, bc = raw_params[0]
    c1 = wc.shape[0]
    w1_flat = np.transpose(np.asarray(wc), (2, 3, 1, 0)).reshape(9 * cin, c1)
    packed['w1'] = jnp.asarray(w1_flat, jnp.bfloat16)
    packed['b1'] = jnp.asarray(bc, jnp.float32).reshape(1, c1)
    sh, sw = _out_hw(h, w)

    # Stages 2 / 3: spatial gather + per-tap channel mix.
    for idx in (2, 3):
        wc, bc = raw_params[idx - 1]
        cin_s, cout_s = wc.shape[1], wc.shape[0]
        g_np, oh, ow = _gather_mats_np(sh, sw)
        wt = np.transpose(np.asarray(wc), (2, 3, 1, 0)).reshape(9, cin_s, cout_s)
        packed[f'g{idx}'] = jnp.asarray(g_np, jnp.bfloat16)
        packed[f'wt{idx}'] = jnp.asarray(wt, jnp.bfloat16)
        packed[f'b{idx}'] = jnp.asarray(bc, jnp.float32).reshape(1, cout_s)
        sh, sw = oh, ow
    return packed


def _im2col_s2(x_nchw):
    """Cheap XLA patch extraction for the network input only (stage 1).
    Columns ordered (kh, kw, ci) to match packed['w1']."""
    n, c, h, w = x_nchw.shape
    ho, wo = _out_hw(h, w)
    xp = jnp.pad(x_nchw, ((0, 0), (0, 0), (1, 1), (1, 1)))
    cols = []
    for kh in range(3):
        for kw in range(3):
            cols.append(xp[:, :, kh:kh + 2 * (ho - 1) + 1:2,
                               kw:kw + 2 * (wo - 1) + 1:2])    # (N, C, Ho, Wo)
    patches = jnp.stack(cols, axis=1)                          # (N, 9, C, Ho, Wo)
    patches = patches.transpose(0, 3, 4, 1, 2)                 # (N, Ho, Wo, 9, C)
    return patches.reshape(n, ho * wo, 9 * c), (ho, wo)


def teacher_net_forward(x_nchw, packed):
    # TeacherNet.forward: eval-mode encoder returning (x1, x2, x3).  self.eval()
    # is a mode flag only; the synthetic encoder is stateless.
    # TODO(synk): original encoder is an externally injected torch backbone
    # (e.g. timm ResNet18 feature extractor); replaced by this deterministic
    # synthetic 3-stage conv encoder with the same multi-scale output pattern.
    n, c, h, w = x_nchw.shape
    c1 = packed['w1'].shape[1]
    c2 = packed['wt2'].shape[2]
    c3 = packed['wt3'].shape[2]
    h1_, w1_ = _out_hw(h, w)
    h2_, w2_ = _out_hw(h1_, w1_)
    h3_, w3_ = _out_hw(h2_, w2_)
    p1, p2, p3 = h1_ * w1_, h2_ * w2_, h3_ * w3_
    dt_out = x_nchw.dtype

    lhs1, _ = _im2col_s2(x_nchw)
    lhs1 = lhs1.astype(jnp.bfloat16)                           # (N, P1, 9*C)

    def _const_spec(arr):
        zeros = (0,) * arr.ndim
        return pl.BlockSpec(arr.shape, lambda b, _z=zeros: _z)  # fetched once

    in_specs = [
        pl.BlockSpec((None, p1, 9 * c), lambda b: (b, 0, 0)),   # per-sample patches
        _const_spec(packed['w1']), _const_spec(packed['b1']),
        _const_spec(packed['g2']), _const_spec(packed['wt2']), _const_spec(packed['b2']),
        _const_spec(packed['g3']), _const_spec(packed['wt3']), _const_spec(packed['b3']),
    ]
    out_specs = (
        pl.BlockSpec((None, p1, c1), lambda b: (b, 0, 0)),
        pl.BlockSpec((None, p2, c2), lambda b: (b, 0, 0)),
        pl.BlockSpec((None, p3, c3), lambda b: (b, 0, 0)),
    )
    out_shape = (
        jax.ShapeDtypeStruct((n, p1, c1), dt_out),
        jax.ShapeDtypeStruct((n, p2, c2), dt_out),
        jax.ShapeDtypeStruct((n, p3, c3), dt_out),
    )

    # Advisory cost hint so XLA can overlap this tiny call with neighbors.
    flops = 2 * n * (p1 * 9 * c * c1
                     + 9 * (p2 * p1 * c1 + p2 * c1 * c2)
                     + 9 * (p3 * p2 * c2 + p3 * c2 * c3))
    bytes_accessed = (int(lhs1.size) * lhs1.dtype.itemsize
                      + sum(int(v.size) * v.dtype.itemsize for v in packed.values())
                      + n * (p1 * c1 + p2 * c2 + p3 * c3) * dt_out.itemsize)

    o1, o2, o3 = pl.pallas_call(
        _fused_teacher_kernel,
        out_shape=out_shape,
        grid=(n,),
        in_specs=in_specs,
        out_specs=out_specs,
        compiler_params=pltpu.CompilerParams(
            dimension_semantics=("parallel",)),   # batch shards across TCs on v7x
        cost_estimate=pl.CostEstimate(flops=flops, transcendentals=0,
                                      bytes_accessed=bytes_accessed),
    )(lhs1, packed['w1'], packed['b1'],
      packed['g2'], packed['wt2'], packed['b2'],
      packed['g3'], packed['wt3'], packed['b3'])

    # Kernel emits NHWC-flat per-sample blocks; convert to PyTorch-style NCHW.
    x1 = o1.reshape(n, h1_, w1_, c1).transpose(0, 3, 1, 2)
    x2 = o2.reshape(n, h2_, w2_, c2).transpose(0, 3, 1, 2)
    x3 = o3.reshape(n, h3_, w3_, c3).transpose(0, 3, 1, 2)
    return x1, x2, x3


if __name__ == "__main__":
    key = jax.random.PRNGKey(0)
    k_x, k_p = jax.random.split(key)
    x = jax.random.normal(k_x, (2, 4, 16, 16), jnp.float32)    # NCHW, like PyTorch
    raw_params = init_teacher_params(k_p, cin=4, widths=(8, 16, 32))
    packed = pack_teacher_params(raw_params, cin=4, hw=(16, 16))

    fwd = jax.jit(teacher_net_forward)
    x1, x2, x3 = fwd(x, packed)
    jax.block_until_ready((x1, x2, x3))

    assert x1.shape == (2, 8, 8, 8)
    assert x2.shape == (2, 16, 4, 4)
    assert x3.shape == (2, 32, 2, 2)
    assert x1.dtype == x2.dtype == x3.dtype == jnp.float32

    # Numerical cross-check against the plain-XLA f32 reference of the same
    # encoder.  Tolerance covers the documented bf16-weight / f32-accumulate path.
    ref = x
    refs = []
    for w_conv, b in raw_params:
        ref = jnp.maximum(_conv3x3_s2_nchw_ref(ref, w_conv, b), 0.0)
        refs.append(ref)
    for got, want in zip((x1, x2, x3), refs):
        err = float(jnp.max(jnp.abs(got - want)))
        assert jnp.allclose(got, want, rtol=5e-2, atol=5e-2), err

    print("KERNEL_OK")
</pallas_src>

<mosaic_0001>
module attributes {stable_mosaic.version = 11 : i64} {
  func.func @_fused_teacher_kernel(%arg0: i32, %arg1: memref<1x64x36xbf16, #tpu.memory_space<vmem>>, %arg2: memref<36x8xbf16, #tpu.memory_space<vmem>>, %arg3: memref<1x8xf32, #tpu.memory_space<vmem>>, %arg4: memref<9x16x64xbf16, #tpu.memory_space<vmem>>, %arg5: memref<9x8x16xbf16, #tpu.memory_space<vmem>>, %arg6: memref<1x16xf32, #tpu.memory_space<vmem>>, %arg7: memref<9x4x16xbf16, #tpu.memory_space<vmem>>, %arg8: memref<9x16x32xbf16, #tpu.memory_space<vmem>>, %arg9: memref<1x32xf32, #tpu.memory_space<vmem>>, %arg10: memref<1x64x8xf32, #tpu.memory_space<vmem>>, %arg11: memref<1x16x16xf32, #tpu.memory_space<vmem>>, %arg12: memref<1x4x32xf32, #tpu.memory_space<vmem>>) attributes {dimension_semantics = [#tpu.dimension_semantics<parallel>], iteration_bounds = array<i64: 2>, scalar_prefetch = 0 : i64, scratch_operands = 0 : i64, tpu.core_type = #tpu.core_type<tc>, window_params = [{transform_indices = @transform_0, window_bounds = array<i64: 1, 64, 36>}, {pipeline_mode = #tpu.pipeline_mode<synchronous>, transform_indices = @transform_1, window_bounds = array<i64: 36, 8>}, {pipeline_mode = #tpu.pipeline_mode<synchronous>, transform_indices = @transform_2, window_bounds = array<i64: 1, 8>}, {pipeline_mode = #tpu.pipeline_mode<synchronous>, transform_indices = @transform_3, window_bounds = array<i64: 9, 16, 64>}, {pipeline_mode = #tpu.pipeline_mode<synchronous>, transform_indices = @transform_4, window_bounds = array<i64: 9, 8, 16>}, {pipeline_mode = #tpu.pipeline_mode<synchronous>, transform_indices = @transform_5, window_bounds = array<i64: 1, 16>}, {pipeline_mode = #tpu.pipeline_mode<synchronous>, transform_indices = @transform_6, window_bounds = array<i64: 9, 4, 16>}, {pipeline_mode = #tpu.pipeline_mode<synchronous>, transform_indices = @transform_7, window_bounds = array<i64: 9, 16, 32>}, {pipeline_mode = #tpu.pipeline_mode<synchronous>, transform_indices = @transform_8, window_bounds = array<i64: 1, 32>}, {transform_indices = @transform_9, window_bounds = array<i64: 1, 64, 8>}, {transform_indices = @transform_10, window_bounds = array<i64: 1, 16, 16>}, {transform_indices = @transform_11, window_bounds = array<i64: 1, 4, 32>}]} {
    %c0 = arith.constant 0 : index
    %c0_0 = arith.constant 0 : index
    %c0_1 = arith.constant 0 : index
    %0 = vector.load %arg1[%c0, %c0_0, %c0_1] : memref<1x64x36xbf16, #tpu.memory_space<vmem>>, vector<1x64x36xbf16>
    %1 = vector.shape_cast %0 : vector<1x64x36xbf16> to vector<64x36xbf16>
    %c0_2 = arith.constant 0 : index
    %c0_3 = arith.constant 0 : index
    %2 = vector.load %arg2[%c0_2, %c0_3] : memref<36x8xbf16, #tpu.memory_space<vmem>>, vector<36x8xbf16>
    %cst = arith.constant dense<0.000000e+00> : vector<64x8xf32>
    %3 = tpu.matmul %1, %2, %cst {dimension_numbers = #tpu.dot_dimension_numbers<[1], [0], [0], [1], [0, 0, 1, 1], [], []>} : vector<64x36xbf16>, vector<36x8xbf16>, vector<64x8xf32> -> vector<64x8xf32>
    %c0_4 = arith.constant 0 : index
    %c0_5 = arith.constant 0 : index
    %4 = vector.load %arg3[%c0_4, %c0_5] : memref<1x8xf32, #tpu.memory_space<vmem>>, vector<1x8xf32>
    %5 = vector.broadcast %4 : vector<1x8xf32> to vector<64x8xf32>
    %6 = arith.addf %3, %5 : vector<64x8xf32>
    %cst_6 = arith.constant 0.000000e+00 : f32
    %7 = vector.broadcast %cst_6 : f32 to vector<64x8xf32>
    %8 = arith.maximumf %6, %7 : vector<64x8xf32>
    %c0_7 = arith.constant 0 : index
    %c0_8 = arith.constant 0 : index
    %c0_9 = arith.constant 0 : index
    %9 = vector.load %arg10[%c0_7, %c0_8, %c0_9] : memref<1x64x8xf32, #tpu.memory_space<vmem>>, vector<1x64x8xf32>
    %10 = vector.shape_cast %9 : vector<1x64x8xf32> to vector<64x8xf32>
    %11 = vector.shape_cast %8 : vector<64x8xf32> to vector<1x64x8xf32>
    tpu.vector_store %arg10[%c0_7, %c0_8, %c0_9], %11 {strides = array<i32>} : memref<1x64x8xf32, #tpu.memory_space<vmem>>, vector<1x64x8xf32>,
    %12 = arith.truncf %8 : vector<64x8xf32> to vector<64x8xbf16>
    %cst_10 = arith.constant 0.000000e+00 : f32
    %13 = vector.broadcast %cst_10 : f32 to vector<16x16xf32>
    %c0_11 = arith.constant 0 : index
    %c0_12 = arith.constant 0 : index
    %c0_13 = arith.constant 0 : index
    %14 = vector.load %arg4[%c0_11, %c0_12, %c0_13] : memref<9x16x64xbf16, #tpu.memory_space<vmem>>, vector<1x16x64xbf16>
    %15 = vector.shape_cast %14 : vector<1x16x64xbf16> to vector<16x64xbf16>
    %cst_14 = arith.constant dense<0.000000e+00> : vector<16x8xf32>
    %16 = tpu.matmul %15, %12, %cst_14 {dimension_numbers = #tpu.dot_dimension_numbers<[1], [0], [0], [1], [0, 0, 1, 1], [], []>} : vector<16x64xbf16>, vector<64x8xbf16>, vector<16x8xf32> -> vector<16x8xf32>
    %17 = arith.truncf %16 : vector<16x8xf32> to vector<16x8xbf16>
    %c0_15 = arith.constant 0 : index
    %c0_16 = arith.constant 0 : index
    %c0_17 = arith.constant 0 : index
    %18 = vector.load %arg5[%c0_15, %c0_16, %c0_17] : memref<9x8x16xbf16, #tpu.memory_space<vmem>>, vector<1x8x16xbf16>
    %19 = vector.shape_cast %18 : vector<1x8x16xbf16> to vector<8x16xbf16>
    %cst_18 = arith.constant dense<0.000000e+00> : vector<16x16xf32>
    %20 = tpu.matmul %17, %19, %cst_18 {dimension_numbers = #tpu.dot_dimension_numbers<[1], [0], [0], [1], [0, 0, 1, 1], [], []>} : vector<16x8xbf16>, vector<8x16xbf16>, vector<16x16xf32> -> vector<16x16xf32>
    %21 = arith.addf %13, %20 : vector<16x16xf32>
    %c1 = arith.constant 1 : index
    %c0_19 = arith.constant 0 : index
    %c0_20 = arith.constant 0 : index
    %22 = vector.load %arg4[%c1, %c0_19, %c0_20] : memref<9x16x64xbf16, #tpu.memory_space<vmem>>, vector<1x16x64xbf16>
    %23 = vector.shape_cast %22 : vector<1x16x64xbf16> to vector<16x64xbf16>
    %cst_21 = arith.constant dense<0.000000e+00> : vector<16x8xf32>
    %24 = tpu.matmul %23, %12, %cst_21 {dimension_numbers = #tpu.dot_dimension_numbers<[1], [0], [0], [1], [0, 0, 1, 1], [], []>} : vector<16x64xbf16>, vector<64x8xbf16>, vector<16x8xf32> -> vector<16x8xf32>
    %25 = arith.truncf %24 : vector<16x8xf32> to vector<16x8xbf16>
    %c1_22 = arith.constant 1 : index
    %c0_23 = arith.constant 0 : index
    %c0_24 = arith.constant 0 : index
    %26 = vector.load %arg5[%c1_22, %c0_23, %c0_24] : memref<9x8x16xbf16, #tpu.memory_space<vmem>>, vector<1x8x16xbf16>
    %27 = vector.shape_cast %26 : vector<1x8x16xbf16> to vector<8x16xbf16>
    %cst_25 = arith.constant dense<0.000000e+00> : vector<16x16xf32>
    %28 = tpu.matmul %25, %27, %cst_25 {dimension_numbers = #tpu.dot_dimension_numbers<[1], [0], [0], [1], [0, 0, 1, 1], [], []>} : vector<16x8xbf16>, vector<8x16xbf16>, vector<16x16xf32> -> vector<16x16xf32>
    %29 = arith.addf %21, %28 : vector<16x16xf32>
    %c2 = arith.constant 2 : index
    %c0_26 = arith.constant 0 : index
    %c0_27 = arith.constant 0 : index
    %30 = vector.load %arg4[%c2, %c0_26, %c0_27] : memref<9x16x64xbf16, #tpu.memory_space<vmem>>, vector<1x16x64xbf16>
    %31 = vector.shape_cast %30 : vector<1x16x64xbf16> to vector<16x64xbf16>
    %cst_28 = arith.constant dense<0.000000e+00> : vector<16x8xf32>
    %32 = tpu.matmul %31, %12, %cst_28 {dimension_numbers = #tpu.dot_dimension_numbers<[1], [0], [0], [1], [0, 0, 1, 1], [], []>} : vector<16x64xbf16>, vector<64x8xbf16>, vector<16x8xf32> -> vector<16x8xf32>
    %33 = arith.truncf %32 : vector<16x8xf32> to vector<16x8xbf16>
    %c2_29 = arith.constant 2 : index
    %c0_30 = arith.constant 0 : index
    %c0_31 = arith.constant 0 : index
    %34 = vector.load %arg5[%c2_29, %c0_30, %c0_31] : memref<9x8x16xbf16, #tpu.memory_space<vmem>>, vector<1x8x16xbf16>
    %35 = vector.shape_cast %34 : vector<1x8x16xbf16> to vector<8x16xbf16>
    %cst_32 = arith.constant dense<0.000000e+00> : vector<16x16xf32>
    %36 = tpu.matmul %33, %35, %cst_32 {dimension_numbers = #tpu.dot_dimension_numbers<[1], [0], [0], [1], [0, 0, 1, 1], [], []>} : vector<16x8xbf16>, vector<8x16xbf16>, vector<16x16xf32> -> vector<16x16xf32>
    %37 = arith.addf %29, %36 : vector<16x16xf32>
    %c3 = arith.constant 3 : index
    %c0_33 = arith.constant 0 : index
    %c0_34 = arith.constant 0 : index
    %38 = vector.load %arg4[%c3, %c0_33, %c0_34] : memref<9x16x64xbf16, #tpu.memory_space<vmem>>, vector<1x16x64xbf16>
    %39 = vector.shape_cast %38 : vector<1x16x64xbf16> to vector<16x64xbf16>
    %cst_35 = arith.constant dense<0.000000e+00> : vector<16x8xf32>
    %40 = tpu.matmul %39, %12, %cst_35 {dimension_numbers = #tpu.dot_dimension_numbers<[1], [0], [0], [1], [0, 0, 1, 1], [], []>} : vector<16x64xbf16>, vector<64x8xbf16>, vector<16x8xf32> -> vector<16x8xf32>
    %41 = arith.truncf %40 : vector<16x8xf32> to vector<16x8xbf16>
    %c3_36 = arith.constant 3 : index
    %c0_37 = arith.constant 0 : index
    %c0_38 = arith.constant 0 : index
    %42 = vector.load %arg5[%c3_36, %c0_37, %c0_38] : memref<9x8x16xbf16, #tpu.memory_space<vmem>>, vector<1x8x16xbf16>
    %43 = vector.shape_cast %42 : vector<1x8x16xbf16> to vector<8x16xbf16>
    %cst_39 = arith.constant dense<0.000000e+00> : vector<16x16xf32>
    %44 = tpu.matmul %41, %43, %cst_39 {dimension_numbers = #tpu.dot_dimension_numbers<[1], [0], [0], [1], [0, 0, 1, 1], [], []>} : vector<16x8xbf16>, vector<8x16xbf16>, vector<16x16xf32> -> vector<16x16xf32>
    %45 = arith.addf %37, %44 : vector<16x16xf32>
    %c4 = arith.constant 4 : index
    %c0_40 = arith.constant 0 : index
    %c0_41 = arith.constant 0 : index
    %46 = vector.load %arg4[%c4, %c0_40, %c0_41] : memref<9x16x64xbf16, #tpu.memory_space<vmem>>, vector<1x16x64xbf16>
    %47 = vector.shape_cast %46 : vector<1x16x64xbf16> to vector<16x64xbf16>
    %cst_42 = arith.constant dense<0.000000e+00> : vector<16x8xf32>
    %48 = tpu.matmul %47, %12, %cst_42 {dimension_numbers = #tpu.dot_dimension_numbers<[1], [0], [0], [1], [0, 0, 1, 1], [], []>} : vector<16x64xbf16>, vector<64x8xbf16>, vector<16x8xf32> -> vector<16x8xf32>
    %49 = arith.truncf %48 : vector<16x8xf32> to vector<16x8xbf16>
    %c4_43 = arith.constant 4 : index
    %c0_44 = arith.constant 0 : index
    %c0_45 = arith.constant 0 : index
    %50 = vector.load %arg5[%c4_43, %c0_44, %c0_45] : memref<9x8x16xbf16, #tpu.memory_space<vmem>>, vector<1x8x16xbf16>
    %51 = vector.shape_cast %50 : vector<1x8x16xbf16> to vector<8x16xbf16>
    %cst_46 = arith.constant dense<0.000000e+00> : vector<16x16xf32>
    %52 = tpu.matmul %49, %51, %cst_46 {dimension_numbers = #tpu.dot_dimension_numbers<[1], [0], [0], [1], [0, 0, 1, 1], [], []>} : vector<16x8xbf16>, vector<8x16xbf16>, vector<16x16xf32> -> vector<16x16xf32>
    %53 = arith.addf %45, %52 : vector<16x16xf32>
    %c5 = arith.constant 5 : index
    %c0_47 = arith.constant 0 : index
    %c0_48 = arith.constant 0 : index
    %54 = vector.load %arg4[%c5, %c0_47, %c0_48] : memref<9x16x64xbf16, #tpu.memory_space<vmem>>, vector<1x16x64xbf16>
    %55 = vector.shape_cast %54 : vector<1x16x64xbf16> to vector<16x64xbf16>
    %cst_49 = arith.constant dense<0.000000e+00> : vector<16x8xf32>
    %56 = tpu.matmul %55, %12, %cst_49 {dimension_numbers = #tpu.dot_dimension_numbers<[1], [0], [0], [1], [0, 0, 1, 1], [], []>} : vector<16x64xbf16>, vector<64x8xbf16>, vector<16x8xf32> -> vector<16x8xf32>
    %57 = arith.truncf %56 : vector<16x8xf32> to vector<16x8xbf16>
    %c5_50 = arith.constant 5 : index
    %c0_51 = arith.constant 0 : index
    %c0_52 = arith.constant 0 : index
    %58 = vector.load %arg5[%c5_50, %c0_51, %c0_52] : memref<9x8x16xbf16, #tpu.memory_space<vmem>>, vector<1x8x16xbf16>
    %59 = vector.shape_cast %58 : vector<1x8x16xbf16> to vector<8x16xbf16>
    %cst_53 = arith.constant dense<0.000000e+00> : vector<16x16xf32>
    %60 = tpu.matmul %57, %59, %cst_53 {dimension_numbers = #tpu.dot_dimension_numbers<[1], [0], [0], [1], [0, 0, 1, 1], [], []>} : vector<16x8xbf16>, vector<8x16xbf16>, vector<16x16xf32> -> vector<16x16xf32>
    %61 = arith.addf %53, %60 : vector<16x16xf32>
    %c6 = arith.constant 6 : index
    %c0_54 = arith.constant 0 : index
    %c0_55 = arith.constant 0 : index
    %62 = vector.load %arg4[%c6, %c0_54, %c0_55] : memref<9x16x64xbf16, #tpu.memory_space<vmem>>, vector<1x16x64xbf16>
    %63 = vector.shape_cast %62 : vector<1x16x64xbf16> to vector<16x64xbf16>
    %cst_56 = arith.constant dense<0.000000e+00> : vector<16x8xf32>
    %64 = tpu.matmul %63, %12, %cst_56 {dimension_numbers = #tpu.dot_dimension_numbers<[1], [0], [0], [1], [0, 0, 1, 1], [], []>} : vector<16x64xbf16>, vector<64x8xbf16>, vector<16x8xf32> -> vector<16x8xf32>
    %65 = arith.truncf %64 : vector<16x8xf32> to vector<16x8xbf16>
    %c6_57 = arith.constant 6 : index
    %c0_58 = arith.constant 0 : index
    %c0_59 = arith.constant 0 : index
    %66 = vector.load %arg5[%c6_57, %c0_58, %c0_59] : memref<9x8x16xbf16, #tpu.memory_space<vmem>>, vector<1x8x16xbf16>
    %67 = vector.shape_cast %66 : vector<1x8x16xbf16> to vector<8x16xbf16>
    %cst_60 = arith.constant dense<0.000000e+00> : vector<16x16xf32>
    %68 = tpu.matmul %65, %67, %cst_60 {dimension_numbers = #tpu.dot_dimension_numbers<[1], [0], [0], [1], [0, 0, 1, 1], [], []>} : vector<16x8xbf16>, vector<8x16xbf16>, vector<16x16xf32> -> vector<16x16xf32>
    %69 = arith.addf %61, %68 : vector<16x16xf32>
    %c7 = arith.constant 7 : index
    %c0_61 = arith.constant 0 : index
    %c0_62 = arith.constant 0 : index
    %70 = vector.load %arg4[%c7, %c0_61, %c0_62] : memref<9x16x64xbf16, #tpu.memory_space<vmem>>, vector<1x16x64xbf16>
    %71 = vector.shape_cast %70 : vector<1x16x64xbf16> to vector<16x64xbf16>
    %cst_63 = arith.constant dense<0.000000e+00> : vector<16x8xf32>
    %72 = tpu.matmul %71, %12, %cst_63 {dimension_numbers = #tpu.dot_dimension_numbers<[1], [0], [0], [1], [0, 0, 1, 1], [], []>} : vector<16x64xbf16>, vector<64x8xbf16>, vector<16x8xf32> -> vector<16x8xf32>
    %73 = arith.truncf %72 : vector<16x8xf32> to vector<16x8xbf16>
    %c7_64 = arith.constant 7 : index
    %c0_65 = arith.constant 0 : index
    %c0_66 = arith.constant 0 : index
    %74 = vector.load %arg5[%c7_64, %c0_65, %c0_66] : memref<9x8x16xbf16, #tpu.memory_space<vmem>>, vector<1x8x16xbf16>
    %75 = vector.shape_cast %74 : vector<1x8x16xbf16> to vector<8x16xbf16>
    %cst_67 = arith.constant dense<0.000000e+00> : vector<16x16xf32>
    %76 = tpu.matmul %73, %75, %cst_67 {dimension_numbers = #tpu.dot_dimension_numbers<[1], [0], [0], [1], [0, 0, 1, 1], [], []>} : vector<16x8xbf16>, vector<8x16xbf16>, vector<16x16xf32> -> vector<16x16xf32>
    %77 = arith.addf %69, %76 : vector<16x16xf32>
    %c8 = arith.constant 8 : index
    %c0_68 = arith.constant 0 : index
    %c0_69 = arith.constant 0 : index
    %78 = vector.load %arg4[%c8, %c0_68, %c0_69] : memref<9x16x64xbf16, #tpu.memory_space<vmem>>, vector<1x16x64xbf16>
    %79 = vector.shape_cast %78 : vector<1x16x64xbf16> to vector<16x64xbf16>
    %cst_70 = arith.constant dense<0.000000e+00> : vector<16x8xf32>
    %80 = tpu.matmul %79, %12, %cst_70 {dimension_numbers = #tpu.dot_dimension_numbers<[1], [0], [0], [1], [0, 0, 1, 1], [], []>} : vector<16x64xbf16>, vector<64x8xbf16>, vector<16x8xf32> -> vector<16x8xf32>
    %81 = arith.truncf %80 : vector<16x8xf32> to vector<16x8xbf16>
    %c8_71 = arith.constant 8 : index
    %c0_72 = arith.constant 0 : index
    %c0_73 = arith.constant 0 : index
    %82 = vector.load %arg5[%c8_71, %c0_72, %c0_73] : memref<9x8x16xbf16, #tpu.memory_space<vmem>>, vector<1x8x16xbf16>
    %83 = vector.shape_cast %82 : vector<1x8x16xbf16> to vector<8x16xbf16>
    %cst_74 = arith.constant dense<0.000000e+00> : vector<16x16xf32>
    %84 = tpu.matmul %81, %83, %cst_74 {dimension_numbers = #tpu.dot_dimension_numbers<[1], [0], [0], [1], [0, 0, 1, 1], [], []>} : vector<16x8xbf16>, vector<8x16xbf16>, vector<16x16xf32> -> vector<16x16xf32>
    %85 = arith.addf %77, %84 : vector<16x16xf32>
    %c0_75 = arith.constant 0 : index
    %c0_76 = arith.constant 0 : index
    %86 = vector.load %arg6[%c0_75, %c0_76] : memref<1x16xf32, #tpu.memory_space<vmem>>, vector<1x16xf32>
    %87 = vector.broadcast %86 : vector<1x16xf32> to vector<16x16xf32>
    %88 = arith.addf %85, %87 : vector<16x16xf32>
    %cst_77 = arith.constant 0.000000e+00 : f32
    %89 = vector.broadcast %cst_77 : f32 to vector<16x16xf32>
    %90 = arith.maximumf %88, %89 : vector<16x16xf32>
    %c0_78 = arith.constant 0 : index
    %c0_79 = arith.constant 0 : index
    %c0_80 = arith.constant 0 : index
    %91 = vector.load %arg11[%c0_78, %c0_79, %c0_80] : memref<1x16x16xf32, #tpu.memory_space<vmem>>, vector<1x16x16xf32>
    %92 = vector.shape_cast %91 : vector<1x16x16xf32> to vector<16x16xf32>
    %93 = vector.shape_cast %90 : vector<16x16xf32> to vector<1x16x16xf32>
    tpu.vector_store %arg11[%c0_78, %c0_79, %c0_80], %93 {strides = array<i32>} : memref<1x16x16xf32, #tpu.memory_space<vmem>>, vector<1x16x16xf32>,
    %94 = arith.truncf %90 : vector<16x16xf32> to vector<16x16xbf16>
    %cst_81 = arith.constant 0.000000e+00 : f32
    %95 = vector.broadcast %cst_81 : f32 to vector<4x32xf32>
    %c0_82 = arith.constant 0 : index
    %c0_83 = arith.constant 0 : index
    %c0_84 = arith.constant 0 : index
    %96 = vector.load %arg7[%c0_82, %c0_83, %c0_84] : memref<9x4x16xbf16, #tpu.memory_space<vmem>>, vector<1x4x16xbf16>
    %97 = vector.shape_cast %96 : vector<1x4x16xbf16> to vector<4x16xbf16>
    %cst_85 = arith.constant dense<0.000000e+00> : vector<4x16xf32>
    %98 = tpu.matmul %97, %94, %cst_85 {dimension_numbers = #tpu.dot_dimension_numbers<[1], [0], [0], [1], [0, 0, 1, 1], [], []>} : vector<4x16xbf16>, vector<16x16xbf16>, vector<4x16xf32> -> vector<4x16xf32>
    %99 = arith.truncf %98 : vector<4x16xf32> to vector<4x16xbf16>
    %c0_86 = arith.constant 0 : index
    %c0_87 = arith.constant 0 : index
    %c0_88 = arith.constant 0 : index
    %100 = vector.load %arg8[%c0_86, %c0_87, %c0_88] : memref<9x16x32xbf16, #tpu.memory_space<vmem>>, vector<1x16x32xbf16>
    %101 = vector.shape_cast %100 : vector<1x16x32xbf16> to vector<16x32xbf16>
    %cst_89 = arith.constant dense<0.000000e+00> : vector<4x32xf32>
    %102 = tpu.matmul %99, %101, %cst_89 {dimension_numbers = #tpu.dot_dimension_numbers<[1], [0], [0], [1], [0, 0, 1, 1], [], []>} : vector<4x16xbf16>, vector<16x32xbf16>, vector<4x32xf32> -> vector<4x32xf32>
    %103 = arith.addf %95, %102 : vector<4x32xf32>
    %c1_90 = arith.constant 1 : index
    %c0_91 = arith.constant 0 : index
    %c0_92 = arith.constant 0 : index
    %104 = vector.load %arg7[%c1_90, %c0_91, %c0_92] : memref<9x4x16xbf16, #tpu.memory_space<vmem>>, vector<1x4x16xbf16>
    %105 = vector.shape_cast %104 : vector<1x4x16xbf16> to vector<4x16xbf16>
    %cst_93 = arith.constant dense<0.000000e+00> : vector<4x16xf32>
    %106 = tpu.matmul %105, %94, %cst_93 {dimension_numbers = #tpu.dot_dimension_numbers<[1], [0], [0], [1], [0, 0, 1, 1], [], []>} : vector<4x16xbf16>, vector<16x16xbf16>, vector<4x16xf32> -> vector<4x16xf32>
    %107 = arith.truncf %106 : vector<4x16xf32> to vector<4x16xbf16>
    %c1_94 = arith.constant 1 : index
    %c0_95 = arith.constant 0 : index
    %c0_96 = arith.constant 0 : index
    %108 = vector.load %arg8[%c1_94, %c0_95, %c0_96] : memref<9x16x32xbf16, #tpu.memory_space<vmem>>, vector<1x16x32xbf16>
    %109 = vector.shape_cast %108 : vector<1x16x32xbf16> to vector<16x32xbf16>
    %cst_97 = arith.constant dense<0.000000e+00> : vector<4x32xf32>
    %110 = tpu.matmul %107, %109, %cst_97 {dimension_numbers = #tpu.dot_dimension_numbers<[1], [0], [0], [1], [0, 0, 1, 1], [], []>} : vector<4x16xbf16>, vector<16x32xbf16>, vector<4x32xf32> -> vector<4x32xf32>
    %111 = arith.addf %103, %110 : vector<4x32xf32>
    %c2_98 = arith.constant 2 : index
    %c0_99 = arith.constant 0 : index
    %c0_100 = arith.constant 0 : index
    %112 = vector.load %arg7[%c2_98, %c0_99, %c0_100] : memref<9x4x16xbf16, #tpu.memory_space<vmem>>, vector<1x4x16xbf16>
    %113 = vector.shape_cast %112 : vector<1x4x16xbf16> to vector<4x16xbf16>
    %cst_101 = arith.constant dense<0.000000e+00> : vector<4x16xf32>
    %114 = tpu.matmul %113, %94, %cst_101 {dimension_numbers = #tpu.dot_dimension_numbers<[1], [0], [0], [1], [0, 0, 1, 1], [], []>} : vector<4x16xbf16>, vector<16x16xbf16>, vector<4x16xf32> -> vector<4x16xf32>
    %115 = arith.truncf %114 : vector<4x16xf32> to vector<4x16xbf16>
    %c2_102 = arith.constant 2 : index
    %c0_103 = arith.constant 0 : index
    %c0_104 = arith.constant 0 : index
    %116 = vector.load %arg8[%c2_102, %c0_103, %c0_104] : memref<9x16x32xbf16, #tpu.memory_space<vmem>>, vector<1x16x32xbf16>
    %117 = vector.shape_cast %116 : vector<1x16x32xbf16> to vector<16x32xbf16>
    %cst_105 = arith.constant dense<0.000000e+00> : vector<4x32xf32>
    %118 = tpu.matmul %115, %117, %cst_105 {dimension_numbers = #tpu.dot_dimension_numbers<[1], [0], [0], [1], [0, 0, 1, 1], [], []>} : vector<4x16xbf16>, vector<16x32xbf16>, vector<4x32xf32> -> vector<4x32xf32>
    %119 = arith.addf %111, %118 : vector<4x32xf32>
    %c3_106 = arith.constant 3 : index
    %c0_107 = arith.constant 0 : index
    %c0_108 = arith.constant 0 : index
    %120 = vector.load %arg7[%c3_106, %c0_107, %c0_108] : memref<9x4x16xbf16, #tpu.memory_space<vmem>>, vector<1x4x16xbf16>
    %121 = vector.shape_cast %120 : vector<1x4x16xbf16> to vector<4x16xbf16>
    %cst_109 = arith.constant dense<0.000000e+00> : vector<4x16xf32>
    %122 = tpu.matmul %121, %94, %cst_109 {dimension_numbers = #tpu.dot_dimension_numbers<[1], [0], [0], [1], [0, 0, 1, 1], [], []>} : vector<4x16xbf16>, vector<16x16xbf16>, vector<4x16xf32> -> vector<4x16xf32>
    %123 = arith.truncf %122 : vector<4x16xf32> to vector<4x16xbf16>
    %c3_110 = arith.constant 3 : index
    %c0_111 = arith.constant 0 : index
    %c0_112 = arith.constant 0 : index
    %124 = vector.load %arg8[%c3_110, %c0_111, %c0_112] : memref<9x16x32xbf16, #tpu.memory_space<vmem>>, vector<1x16x32xbf16>
    %125 = vector.shape_cast %124 : vector<1x16x32xbf16> to vector<16x32xbf16>
    %cst_113 = arith.constant dense<0.000000e+00> : vector<4x32xf32>
    %126 = tpu.matmul %123, %125, %cst_113 {dimension_numbers = #tpu.dot_dimension_numbers<[1], [0], [0], [1], [0, 0, 1, 1], [], []>} : vector<4x16xbf16>, vector<16x32xbf16>, vector<4x32xf32> -> vector<4x32xf32>
    %127 = arith.addf %119, %126 : vector<4x32xf32>
    %c4_114 = arith.constant 4 : index
    %c0_115 = arith.constant 0 : index
    %c0_116 = arith.constant 0 : index
    %128 = vector.load %arg7[%c4_114, %c0_115, %c0_116] : memref<9x4x16xbf16, #tpu.memory_space<vmem>>, vector<1x4x16xbf16>
    %129 = vector.shape_cast %128 : vector<1x4x16xbf16> to vector<4x16xbf16>
    %cst_117 = arith.constant dense<0.000000e+00> : vector<4x16xf32>
    %130 = tpu.matmul %129, %94, %cst_117 {dimension_numbers = #tpu.dot_dimension_numbers<[1], [0], [0], [1], [0, 0, 1, 1], [], []>} : vector<4x16xbf16>, vector<16x16xbf16>, vector<4x16xf32> -> vector<4x16xf32>
    %131 = arith.truncf %130 : vector<4x16xf32> to vector<4x16xbf16>
    %c4_118 = arith.constant 4 : index
    %c0_119 = arith.constant 0 : index
    %c0_120 = arith.constant 0 : index
    %132 = vector.load %arg8[%c4_118, %c0_119, %c0_120] : memref<9x16x32xbf16, #tpu.memory_space<vmem>>, vector<1x16x32xbf16>
    %133 = vector.shape_cast %132 : vector<1x16x32xbf16> to vector<16x32xbf16>
    %cst_121 = arith.constant dense<0.000000e+00> : vector<4x32xf32>
    %134 = tpu.matmul %131, %133, %cst_121 {dimension_numbers = #tpu.dot_dimension_numbers<[1], [0], [0], [1], [0, 0, 1, 1], [], []>} : vector<4x16xbf16>, vector<16x32xbf16>, vector<4x32xf32> -> vector<4x32xf32>
    %135 = arith.addf %127, %134 : vector<4x32xf32>
    %c5_122 = arith.constant 5 : index
    %c0_123 = arith.constant 0 : index
    %c0_124 = arith.constant 0 : index
    %136 = vector.load %arg7[%c5_122, %c0_123, %c0_124] : memref<9x4x16xbf16, #tpu.memory_space<vmem>>, vector<1x4x16xbf16>
    %137 = vector.shape_cast %136 : vector<1x4x16xbf16> to vector<4x16xbf16>
    %cst_125 = arith.constant dense<0.000000e+00> : vector<4x16xf32>
    %138 = tpu.matmul %137, %94, %cst_125 {dimension_numbers = #tpu.dot_dimension_numbers<[1], [0], [0], [1], [0, 0, 1, 1], [], []>} : vector<4x16xbf16>, vector<16x16xbf16>, vector<4x16xf32> -> vector<4x16xf32>
    %139 = arith.truncf %138 : vector<4x16xf32> to vector<4x16xbf16>
    %c5_126 = arith.constant 5 : index
    %c0_127 = arith.constant 0 : index
    %c0_128 = arith.constant 0 : index
    %140 = vector.load %arg8[%c5_126, %c0_127, %c0_128] : memref<9x16x32xbf16, #tpu.memory_space<vmem>>, vector<1x16x32xbf16>
    %141 = vector.shape_cast %140 : vector<1x16x32xbf16> to vector<16x32xbf16>
    %cst_129 = arith.constant dense<0.000000e+00> : vector<4x32xf32>
    %142 = tpu.matmul %139, %141, %cst_129 {dimension_numbers = #tpu.dot_dimension_numbers<[1], [0], [0], [1], [0, 0, 1, 1], [], []>} : vector<4x16xbf16>, vector<16x32xbf16>, vector<4x32xf32> -> vector<4x32xf32>
    %143 = arith.addf %135, %142 : vector<4x32xf32>
    %c6_130 = arith.constant 6 : index
    %c0_131 = arith.constant 0 : index
    %c0_132 = arith.constant 0 : index
    %144 = vector.load %arg7[%c6_130, %c0_131, %c0_132] : memref<9x4x16xbf16, #tpu.memory_space<vmem>>, vector<1x4x16xbf16>
    %145 = vector.shape_cast %144 : vector<1x4x16xbf16> to vector<4x16xbf16>
    %cst_133 = arith.constant dense<0.000000e+00> : vector<4x16xf32>
    %146 = tpu.matmul %145, %94, %cst_133 {dimension_numbers = #tpu.dot_dimension_numbers<[1], [0], [0], [1], [0, 0, 1, 1], [], []>} : vector<4x16xbf16>, vector<16x16xbf16>, vector<4x16xf32> -> vector<4x16xf32>
    %147 = arith.truncf %146 : vector<4x16xf32> to vector<4x16xbf16>
    %c6_134 = arith.constant 6 : index
    %c0_135 = arith.constant 0 : index
    %c0_136 = arith.constant 0 : index
    %148 = vector.load %arg8[%c6_134, %c0_135, %c0_136] : memref<9x16x32xbf16, #tpu.memory_space<vmem>>, vector<1x16x32xbf16>
    %149 = vector.shape_cast %148 : vector<1x16x32xbf16> to vector<16x32xbf16>
    %cst_137 = arith.constant dense<0.000000e+00> : vector<4x32xf32>
    %150 = tpu.matmul %147, %149, %cst_137 {dimension_numbers = #tpu.dot_dimension_numbers<[1], [0], [0], [1], [0, 0, 1, 1], [], []>} : vector<4x16xbf16>, vector<16x32xbf16>, vector<4x32xf32> -> vector<4x32xf32>
    %151 = arith.addf %143, %150 : vector<4x32xf32>
    %c7_138 = arith.constant 7 : index
    %c0_139 = arith.constant 0 : index
    %c0_140 = arith.constant 0 : index
    %152 = vector.load %arg7[%c7_138, %c0_139, %c0_140] : memref<9x4x16xbf16, #tpu.memory_space<vmem>>, vector<1x4x16xbf16>
    %153 = vector.shape_cast %152 : vector<1x4x16xbf16> to vector<4x16xbf16>
    %cst_141 = arith.constant dense<0.000000e+00> : vector<4x16xf32>
    %154 = tpu.matmul %153, %94, %cst_141 {dimension_numbers = #tpu.dot_dimension_numbers<[1], [0], [0], [1], [0, 0, 1, 1], [], []>} : vector<4x16xbf16>, vector<16x16xbf16>, vector<4x16xf32> -> vector<4x16xf32>
    %155 = arith.truncf %154 : vector<4x16xf32> to vector<4x16xbf16>
    %c7_142 = arith.constant 7 : index
    %c0_143 = arith.constant 0 : index
    %c0_144 = arith.constant 0 : index
    %156 = vector.load %arg8[%c7_142, %c0_143, %c0_144] : memref<9x16x32xbf16, #tpu.memory_space<vmem>>, vector<1x16x32xbf16>
    %157 = vector.shape_cast %156 : vector<1x16x32xbf16> to vector<16x32xbf16>
    %cst_145 = arith.constant dense<0.000000e+00> : vector<4x32xf32>
    %158 = tpu.matmul %155, %157, %cst_145 {dimension_numbers = #tpu.dot_dimension_numbers<[1], [0], [0], [1], [0, 0, 1, 1], [], []>} : vector<4x16xbf16>, vector<16x32xbf16>, vector<4x32xf32> -> vector<4x32xf32>
    %159 = arith.addf %151, %158 : vector<4x32xf32>
    %c8_146 = arith.constant 8 : index
    %c0_147 = arith.constant 0 : index
    %c0_148 = arith.constant 0 : index
    %160 = vector.load %arg7[%c8_146, %c0_147, %c0_148] : memref<9x4x16xbf16, #tpu.memory_space<vmem>>, vector<1x4x16xbf16>
    %161 = vector.shape_cast %160 : vector<1x4x16xbf16> to vector<4x16xbf16>
    %cst_149 = arith.constant dense<0.000000e+00> : vector<4x16xf32>
    %162 = tpu.matmul %161, %94, %cst_149 {dimension_numbers = #tpu.dot_dimension_numbers<[1], [0], [0], [1], [0, 0, 1, 1], [], []>} : vector<4x16xbf16>, vector<16x16xbf16>, vector<4x16xf32> -> vector<4x16xf32>
    %163 = arith.truncf %162 : vector<4x16xf32> to vector<4x16xbf16>
    %c8_150 = arith.constant 8 : index
    %c0_151 = arith.constant 0 : index
    %c0_152 = arith.constant 0 : index
    %164 = vector.load %arg8[%c8_150, %c0_151, %c0_152] : memref<9x16x32xbf16, #tpu.memory_space<vmem>>, vector<1x16x32xbf16>
    %165 = vector.shape_cast %164 : vector<1x16x32xbf16> to vector<16x32xbf16>
    %cst_153 = arith.constant dense<0.000000e+00> : vector<4x32xf32>
    %166 = tpu.matmul %163, %165, %cst_153 {dimension_numbers = #tpu.dot_dimension_numbers<[1], [0], [0], [1], [0, 0, 1, 1], [], []>} : vector<4x16xbf16>, vector<16x32xbf16>, vector<4x32xf32> -> vector<4x32xf32>
    %167 = arith.addf %159, %166 : vector<4x32xf32>
    %c0_154 = arith.constant 0 : index
    %c0_155 = arith.constant 0 : index
    %168 = vector.load %arg9[%c0_154, %c0_155] : memref<1x32xf32, #tpu.memory_space<vmem>>, vector<1x32xf32>
    %169 = vector.broadcast %168 : vector<1x32xf32> to vector<4x32xf32>
    %170 = arith.addf %167, %169 : vector<4x32xf32>
    %cst_156 = arith.constant 0.000000e+00 : f32
    %171 = vector.broadcast %cst_156 : f32 to vector<4x32xf32>
    %172 = arith.maximumf %170, %171 : vector<4x32xf32>
    %c0_157 = arith.constant 0 : index
    %c0_158 = arith.constant 0 : index
    %c0_159 = arith.constant 0 : index
    %173 = vector.load %arg12[%c0_157, %c0_158, %c0_159] : memref<1x4x32xf32, #tpu.memory_space<vmem>>, vector<1x4x32xf32>
    %174 = vector.shape_cast %173 : vector<1x4x32xf32> to vector<4x32xf32>
    %175 = vector.shape_cast %172 : vector<4x32xf32> to vector<1x4x32xf32>
    tpu.vector_store %arg12[%c0_157, %c0_158, %c0_159], %175 {strides = array<i32>} : memref<1x4x32xf32, #tpu.memory_space<vmem>>, vector<1x4x32xf32>,
    return
  }
  func.func @transform_0(%arg0: i32) -> (i32, i32, i32) {
    %c0_i32 = arith.constant 0 : i32
    %c0_i32_0 = arith.constant 0 : i32
    %c0_i32_1 = arith.constant 0 : i32
    return %arg0, %c0_i32, %c0_i32_0 : i32, i32, i32
  }
  func.func @transform_1(%arg0: i32) -> (i32, i32) {
    %c0_i32 = arith.constant 0 : i32
    %c0_i32_0 = arith.constant 0 : i32
    %c0_i32_1 = arith.constant 0 : i32
    return %c0_i32, %c0_i32_0 : i32, i32
  }
  func.func @transform_2(%arg0: i32) -> (i32, i32) {
    %c0_i32 = arith.constant 0 : i32
    %c0_i32_0 = arith.constant 0 : i32
    %c0_i32_1 = arith.constant 0 : i32
    return %c0_i32, %c0_i32_0 : i32, i32
  }
  func.func @transform_3(%arg0: i32) -> (i32, i32, i32) {
    %c0_i32 = arith.constant 0 : i32
    %c0_i32_0 = arith.constant 0 : i32
    %c0_i32_1 = arith.constant 0 : i32
    %c0_i32_2 = arith.constant 0 : i32
    return %c0_i32, %c0_i32_0, %c0_i32_1 : i32, i32, i32
  }
  func.func @transform_4(%arg0: i32) -> (i32, i32, i32) {
    %c0_i32 = arith.constant 0 : i32
    %c0_i32_0 = arith.constant 0 : i32
    %c0_i32_1 = arith.constant 0 : i32
    %c0_i32_2 = arith.constant 0 : i32
    return %c0_i32, %c0_i32_0, %c0_i32_1 : i32, i32, i32
  }
  func.func @transform_5(%arg0: i32) -> (i32, i32) {
    %c0_i32 = arith.constant 0 : i32
    %c0_i32_0 = arith.constant 0 : i32
    %c0_i32_1 = arith.constant 0 : i32
    return %c0_i32, %c0_i32_0 : i32, i32
  }
  func.func @transform_6(%arg0: i32) -> (i32, i32, i32) {
    %c0_i32 = arith.constant 0 : i32
    %c0_i32_0 = arith.constant 0 : i32
    %c0_i32_1 = arith.constant 0 : i32
    %c0_i32_2 = arith.constant 0 : i32
    return %c0_i32, %c0_i32_0, %c0_i32_1 : i32, i32, i32
  }
  func.func @transform_7(%arg0: i32) -> (i32, i32, i32) {
    %c0_i32 = arith.constant 0 : i32
    %c0_i32_0 = arith.constant 0 : i32
    %c0_i32_1 = arith.constant 0 : i32
    %c0_i32_2 = arith.constant 0 : i32
    return %c0_i32, %c0_i32_0, %c0_i32_1 : i32, i32, i32
  }
  func.func @transform_8(%arg0: i32) -> (i32, i32) {
    %c0_i32 = arith.constant 0 : i32
    %c0_i32_0 = arith.constant 0 : i32
    %c0_i32_1 = arith.constant 0 : i32
    return %c0_i32, %c0_i32_0 : i32, i32
  }
  func.func @transform_9(%arg0: i32) -> (i32, i32, i32) {
    %c0_i32 = arith.constant 0 : i32
    %c0_i32_0 = arith.constant 0 : i32
    %c0_i32_1 = arith.constant 0 : i32
    return %arg0, %c0_i32, %c0_i32_0 : i32, i32, i32
  }
  func.func @transform_10(%arg0: i32) -> (i32, i32, i32) {
    %c0_i32 = arith.constant 0 : i32
    %c0_i32_0 = arith.constant 0 : i32
    %c0_i32_1 = arith.constant 0 : i32
    return %arg0, %c0_i32, %c0_i32_0 : i32, i32, i32
  }
  func.func @transform_11(%arg0: i32) -> (i32, i32, i32) {
    %c0_i32 = arith.constant 0 : i32
    %c0_i32_0 = arith.constant 0 : i32
    %c0_i32_1 = arith.constant 0 : i32
    return %arg0, %c0_i32, %c0_i32_0 : i32, i32, i32
  }
}

</mosaic_0001>

<llo_original>
// kernel: teacher_net_forward.1
$region0: #{teacher_net_forward.1}
  #allocation0 [shape = 'u32[]', space=smem, size = 0x4, offset = 0x4, fixed_abs, tag = 'smem constant byte address 0x4 - core index']
  #allocation1 [shape = 'u32[72,128]{1,0:T(1,128)}', space=vmem, size = 0x9000, scoped, tag = 'internal scratch']
  %s0 = inlined_call_operand.vmem [shape: bf16[2,64,36], index: 0, kind: input, shape index: {}]
  %s1 = inlined_call_operand.vmem [shape: bf16[36,8], index: 1, kind: input, shape index: {}]
  %s2 = inlined_call_operand.vmem [shape: f32[1,8], index: 2, kind: input, shape index: {}]
  %s3 = inlined_call_operand.vmem [shape: bf16[9,16,64], index: 3, kind: input, shape index: {}]
  %s4 = inlined_call_operand.vmem [shape: bf16[9,8,16], index: 4, kind: input, shape index: {}]
  %s5 = inlined_call_operand.vmem [shape: f32[1,16], index: 5, kind: input, shape index: {}]
  %s6 = inlined_call_operand.vmem [shape: bf16[9,4,16], index: 6, kind: input, shape index: {}]
  %s7 = inlined_call_operand.vmem [shape: bf16[9,16,32], index: 7, kind: input, shape index: {}]
  %s8 = inlined_call_operand.vmem [shape: f32[1,32], index: 8, kind: input, shape index: {}]
  %s9 = inlined_call_operand.vmem [shape: f32[2,64,8], index: 9, kind: output, shape index: {0}]
  %s10 = inlined_call_operand.hbm [shape: f32[2,16,16], index: 10, kind: output, shape index: {1}]
  %s11 = inlined_call_operand.hbm [shape: f32[2,4,32], index: 11, kind: output, shape index: {2}]
  %12 = xla_tuple %s9, %s10, %s11
  %s13 = sld [smem:[#allocation0]]
  $region85: #{teacher_net_forward.1} parent=0
    _
  %s15 = ssub.s32 1, %s13
  %s16 = scalar_select 0, %s15, %s13
  $region1: #{teacher_net_forward.1} parent=0
    #allocation2 [shape = 'u8[16384]{0}', space=vmem, size = 0x4000, scoped, tag = 'output window, operand 1']
    #allocation3 [shape = 's32[2]{0}', space=sflag, size = 0x8, scoped, tag = 'scoped memory for teacher_net_forward.1']
    #allocation4 [shape = 'u8[4096]{0}', space=vmem, size = 0x1000, scoped, tag = 'output window, operand 2']
    #allocation5 [shape = 's32[2]{0}', space=sflag, size = 0x8, scoped, tag = 'scoped memory for teacher_net_forward.1']
    %17 = vsyncpa [#allocation3], 0
    %s18 = scalar_lea.sflag [#allocation3], 1
    %19 = vsyncpa %s18, 0
    %20 = vsyncpa [#allocation5], 0
    %s21 = scalar_lea.sflag [#allocation5], 1
    %22 = vsyncpa %s21, 0
    loop: start=0, step=1, limit=4
    $region2: #{teacher_net_forward.1} parent=1 // loop_pre_header
      _
    $region3: #{teacher_net_forward.1} parent=1 // loop_header
      %s24 = sphi 0, %s28
      %p25 = scmp.ge.s32.totalorder %s24, 4
      %s34 = sphi 0, %s36
      %s37 = sphi 0, %s34
      %s38 = sphi 0, %s37
      %s54 = sphi 0, %s38
      %s58 = sphi 0, %s58
      %s60 = sphi 0, %s58
      %s61 = sphi 0, %s60
      %s75 = sphi 0, %s61
      %s79 = sphi 0, %s79
      %s81 = sphi 0, %s79
      %s82 = sphi 0, %s81
      %s96 = sphi 0, %s82
      %s100 = sphi 0, %s100
      %s102 = sphi 0, %s100
      %s103 = sphi 0, %s102
      %s117 = sphi 0, %s103
      %s121 = sphi 0, %s121
      %s123 = sphi 0, %s121
      %s124 = sphi 0, %s123
      %s138 = sphi 0, %s124
      %s142 = sphi 0, %s142
      %s144 = sphi 0, %s142
      %s145 = sphi 0, %s144
      %s159 = sphi 0, %s145
      %s163 = sphi 0, %s163
      %s165 = sphi 0, %s163
      %s166 = sphi 0, %s165
      %s180 = sphi 0, %s166
      %s184 = sphi 0, %s184
      %s186 = sphi 0, %s184
      %s187 = sphi 0, %s186
      %s201 = sphi 0, %s187
      %s205 = sphi 0, %s205
      %s207 = sphi 0, %s205
      %s208 = sphi 0, %s207
      %s222 = sphi 0, %s208
      %s228 = sphi 0, %s230
      %s231 = sphi 0, %s228
      %s232 = sphi 0, %s231
      %s248 = sphi 0, %s232
      %s254 = sphi 0, %s256
      %s257 = sphi 0, %s254
      %s258 = sphi 0, %s257
      %s274 = sphi 0, %s258
      %s280 = sphi 0, %s282
      %s283 = sphi 0, %s280
      %s284 = sphi 0, %s283
      %s300 = sphi 0, %s284
    $region4: #{teacher_net_forward.1} parent=1 // loop_header_branch
      %27 = sbr.rel (%p25) target = $region8
    $region5: #{teacher_net_forward.1} parent=1 // loop_body
      %s29 = ssub.s32 %s24, 1
      %s30 = ssub.s32 %s24, 2
      %s31 = sadd.s32 %s24, 1
      %s32 = ssub.s32 %s24, %s31
      %p33 = scmp.eq.s32.totalorder %s32, 0
      %s35 = sadd.s32 %s34, 1
      %s36 = scalar_select %p33, %s34, %s35
      %p39 = pneg %p33
      %p40 = scmp.eq.s32.totalorder %s24, 1
      %p41 = por %p39, %p40
      %p42 = scmp.ne.s32.totalorder %s34, %s37
      %p43 = scmp.eq.s32.totalorder %s24, 0
      %p44 = por %p42, %p43
      %p45 = scmp.ne.s32.totalorder %s34, %s37
      %p46 = scmp.eq.s32.totalorder %s29, 1
      %p47 = por %p45, %p46
      %p48 = scmp.ne.s32.totalorder %s37, %s38
      %p49 = scmp.eq.s32.totalorder %s29, 0
      %p50 = por %p48, %p49
      %p51 = scmp.ne.s32.totalorder %s37, %s38
      %p52 = scmp.eq.s32.totalorder %s30, 1
      %p53 = por %p51, %p52
      %p55 = scmp.ne.s32.totalorder %s38, %s54
      %p56 = scmp.eq.s32.totalorder %s30, 0
      %p57 = por %p55, %p56
      %s59 = sadd.s32 %s58, 1
      %p62 = scmp.eq.s32.totalorder %s24, 1
      %p63 = scmp.ne.s32.totalorder %s58, %s60
      %p64 = scmp.eq.s32.totalorder %s24, 0
      %p65 = por %p63, %p64
      %p66 = scmp.ne.s32.totalorder %s58, %s60
      %p67 = scmp.eq.s32.totalorder %s29, 1
      %p68 = por %p66, %p67
      %p69 = scmp.ne.s32.totalorder %s60, %s61
      %p70 = scmp.eq.s32.totalorder %s29, 0
      %p71 = por %p69, %p70
      %p72 = scmp.ne.s32.totalorder %s60, %s61
      %p73 = scmp.eq.s32.totalorder %s30, 1
      %p74 = por %p72, %p73
      %p76 = scmp.ne.s32.totalorder %s61, %s75
      %p77 = scmp.eq.s32.totalorder %s30, 0
      %p78 = por %p76, %p77
      %s80 = sadd.s32 %s79, 1
      %p83 = scmp.eq.s32.totalorder %s24, 1
      %p84 = scmp.ne.s32.totalorder %s79, %s81
      %p85 = scmp.eq.s32.totalorder %s24, 0
      %p86 = por %p84, %p85
      %p87 = scmp.ne.s32.totalorder %s79, %s81
      %p88 = scmp.eq.s32.totalorder %s29, 1
      %p89 = por %p87, %p88
      %p90 = scmp.ne.s32.totalorder %s81, %s82
      %p91 = scmp.eq.s32.totalorder %s29, 0
      %p92 = por %p90, %p91
      %p93 = scmp.ne.s32.totalorder %s81, %s82
      %p94 = scmp.eq.s32.totalorder %s30, 1
      %p95 = por %p93, %p94
      %p97 = scmp.ne.s32.totalorder %s82, %s96
      %p98 = scmp.eq.s32.totalorder %s30, 0
      %p99 = por %p97, %p98
      %s101 = sadd.s32 %s100, 1
      %p104 = scmp.eq.s32.totalorder %s24, 1
      %p105 = scmp.ne.s32.totalorder %s100, %s102
      %p106 = scmp.eq.s32.totalorder %s24, 0
      %p107 = por %p105, %p106
      %p108 = scmp.ne.s32.totalorder %s100, %s102
      %p109 = scmp.eq.s32.totalorder %s29, 1
      %p110 = por %p108, %p109
      %p111 = scmp.ne.s32.totalorder %s102, %s103
      %p112 = scmp.eq.s32.totalorder %s29, 0
      %p113 = por %p111, %p112
      %p114 = scmp.ne.s32.totalorder %s102, %s103
      %p115 = scmp.eq.s32.totalorder %s30, 1
      %p116 = por %p114, %p115
      %p118 = scmp.ne.s32.totalorder %s103, %s117
      %p119 = scmp.eq.s32.totalorder %s30, 0
      %p120 = por %p118, %p119
      %s122 = sadd.s32 %s121, 1
      %p125 = scmp.eq.s32.totalorder %s24, 1
      %p126 = scmp.ne.s32.totalorder %s121, %s123
      %p127 = scmp.eq.s32.totalorder %s24, 0
      %p128 = por %p126, %p127
      %p129 = scmp.ne.s32.totalorder %s121, %s123
      %p130 = scmp.eq.s32.totalorder %s29, 1
      %p131 = por %p129, %p130
      %p132 = scmp.ne.s32.totalorder %s123, %s124
      %p133 = scmp.eq.s32.totalorder %s29, 0
      %p134 = por %p132, %p133
      %p135 = scmp.ne.s32.totalorder %s123, %s124
      %p136 = scmp.eq.s32.totalorder %s30, 1
      %p137 = por %p135, %p136
      %p139 = scmp.ne.s32.totalorder %s124, %s138
      %p140 = scmp.eq.s32.totalorder %s30, 0
      %p141 = por %p139, %p140
      %s143 = sadd.s32 %s142, 1
      %p146 = scmp.eq.s32.totalorder %s24, 1
      %p147 = scmp.ne.s32.totalorder %s142, %s144
      %p148 = scmp.eq.s32.totalorder %s24, 0
      %p149 = por %p147, %p148
      %p150 = scmp.ne.s32.totalorder %s142, %s144
      %p151 = scmp.eq.s32.totalorder %s29, 1
      %p152 = por %p150, %p151
      %p153 = scmp.ne.s32.totalorder %s144, %s145
      %p154 = scmp.eq.s32.totalorder %s29, 0
      %p155 = por %p153, %p154
      %p156 = scmp.ne.s32.totalorder %s144, %s145
      %p157 = scmp.eq.s32.totalorder %s30, 1
      %p158 = por %p156, %p157
      %p160 = scmp.ne.s32.totalorder %s145, %s159
      %p161 = scmp.eq.s32.totalorder %s30, 0
      %p162 = por %p160, %p161
      %s164 = sadd.s32 %s163, 1
      %p167 = scmp.eq.s32.totalorder %s24, 1
      %p168 = scmp.ne.s32.totalorder %s163, %s165
      %p169 = scmp.eq.s32.totalorder %s24, 0
      %p170 = por %p168, %p169
      %p171 = scmp.ne.s32.totalorder %s163, %s165
      %p172 = scmp.eq.s32.totalorder %s29, 1
      %p173 = por %p171, %p172
      %p174 = scmp.ne.s32.totalorder %s165, %s166
      %p175 = scmp.eq.s32.totalorder %s29, 0
      %p176 = por %p174, %p175
      %p177 = scmp.ne.s32.totalorder %s165, %s166
      %p178 = scmp.eq.s32.totalorder %s30, 1
      %p179 = por %p177, %p178
      %p181 = scmp.ne.s32.totalorder %s166, %s180
      %p182 = scmp.eq.s32.totalorder %s30, 0
      %p183 = por %p181, %p182
      %s185 = sadd.s32 %s184, 1
      %p188 = scmp.eq.s32.totalorder %s24, 1
      %p189 = scmp.ne.s32.totalorder %s184, %s186
      %p190 = scmp.eq.s32.totalorder %s24, 0
      %p191 = por %p189, %p190
      %p192 = scmp.ne.s32.totalorder %s184, %s186
      %p193 = scmp.eq.s32.totalorder %s29, 1
      %p194 = por %p192, %p193
      %p195 = scmp.ne.s32.totalorder %s186, %s187
      %p196 = scmp.eq.s32.totalorder %s29, 0
      %p197 = por %p195, %p196
      %p198 = scmp.ne.s32.totalorder %s186, %s187
      %p199 = scmp.eq.s32.totalorder %s30, 1
      %p200 = por %p198, %p199
      %p202 = scmp.ne.s32.totalorder %s187, %s201
      %p203 = scmp.eq.s32.totalorder %s30, 0
      %p204 = por %p202, %p203
      %s206 = sadd.s32 %s205, 1
      %p209 = scmp.eq.s32.totalorder %s24, 1
      %p210 = scmp.ne.s32.totalorder %s205, %s207
      %p211 = scmp.eq.s32.totalorder %s24, 0
      %p212 = por %p210, %p211
      %p213 = scmp.ne.s32.totalorder %s205, %s207
      %p214 = scmp.eq.s32.totalorder %s29, 1
      %p215 = por %p213, %p214
      %p216 = scmp.ne.s32.totalorder %s207, %s208
      %p217 = scmp.eq.s32.totalorder %s29, 0
      %p218 = por %p216, %p217
      %p219 = scmp.ne.s32.totalorder %s207, %s208
      %p220 = scmp.eq.s32.totalorder %s30, 1
      %p221 = por %p219, %p220
      %p223 = scmp.ne.s32.totalorder %s208, %s222
      %p224 = scmp.eq.s32.totalorder %s30, 0
      %p225 = por %p223, %p224
      %s226 = ssub.s32 %s24, %s31
      %p227 = scmp.eq.s32.totalorder %s226, 0
      %s229 = sadd.s32 %s228, 1
      %s230 = scalar_select %p227, %s228, %s229
      %p233 = pneg %p227
      %p234 = scmp.eq.s32.totalorder %s24, 1
      %p235 = por %p233, %p234
      %p236 = scmp.ne.s32.totalorder %s228, %s231
      %p237 = scmp.eq.s32.totalorder %s24, 0
      %p238 = por %p236, %p237
      %p239 = scmp.ne.s32.totalorder %s228, %s231
      %p240 = scmp.eq.s32.totalorder %s29, 1
      %p241 = por %p239, %p240
      %p242 = scmp.ne.s32.totalorder %s231, %s232
      %p243 = scmp.eq.s32.totalorder %s29, 0
      %p244 = por %p242, %p243
      %p245 = scmp.ne.s32.totalorder %s231, %s232
      %p246 = scmp.eq.s32.totalorder %s30, 1
      %p247 = por %p245, %p246
      %p249 = scmp.ne.s32.totalorder %s232, %s248
      %p250 = scmp.eq.s32.totalorder %s30, 0
      %p251 = por %p249, %p250
      %s252 = ssub.s32 %s24, %s31
      %p253 = scmp.eq.s32.totalorder %s252, 0
      %s255 = sadd.s32 %s254, 1
      %s256 = scalar_select %p253, %s254, %s255
      %p259 = pneg %p253
      %p260 = scmp.eq.s32.totalorder %s24, 1
      %p261 = por %p259, %p260
      %p262 = scmp.ne.s32.totalorder %s254, %s257
      %p263 = scmp.eq.s32.totalorder %s24, 0
      %p264 = por %p262, %p263
      %p265 = scmp.ne.s32.totalorder %s254, %s257
      %p266 = scmp.eq.s32.totalorder %s29, 1
      %p267 = por %p265, %p266
      %p268 = scmp.ne.s32.totalorder %s257, %s258
      %p269 = scmp.eq.s32.totalorder %s29, 0
      %p270 = por %p268, %p269
      %p271 = scmp.ne.s32.totalorder %s257, %s258
      %p272 = scmp.eq.s32.totalorder %s30, 1
      %p273 = por %p271, %p272
      %p275 = scmp.ne.s32.totalorder %s258, %s274
      %p276 = scmp.eq.s32.totalorder %s30, 0
      %p277 = por %p275, %p276
      %s278 = ssub.s32 %s24, %s31
      %p279 = scmp.eq.s32.totalorder %s278, 0
      %s281 = sadd.s32 %s280, 1
      %s282 = scalar_select %p279, %s280, %s281
      %p285 = pneg %p279
      %p286 = scmp.eq.s32.totalorder %s24, 1
      %p287 = por %p285, %p286
      %p288 = scmp.ne.s32.totalorder %s280, %s283
      %p289 = scmp.eq.s32.totalorder %s24, 0
      %p290 = por %p288, %p289
      %p291 = scmp.ne.s32.totalorder %s280, %s283
      %p292 = scmp.eq.s32.totalorder %s29, 1
      %p293 = por %p291, %p292
      %p294 = scmp.ne.s32.totalorder %s283, %s284
      %p295 = scmp.eq.s32.totalorder %s29, 0
      %p296 = por %p294, %p295
      %p297 = scmp.ne.s32.totalorder %s283, %s284
      %p298 = scmp.eq.s32.totalorder %s30, 1
      %p299 = por %p297, %p298
      %p301 = scmp.ne.s32.totalorder %s284, %s300
      %p302 = scmp.eq.s32.totalorder %s30, 0
      %p303 = por %p301, %p302
      %p304 = scmp.le.s32.totalorder 1, %s24
      %p305 = scmp.lt.s32.totalorder %s24, 3
      %p306 = pnand %p304, %p305
      %p307 = pneg %p306
      // Predicated region
      $region9: #{teacher_net_forward.1} parent=5 // pred_check
        _
      $region10: #{teacher_net_forward.1} parent=5 // pred_check_branch
        %309 = sbr.rel (%p306) target = $region12
      $region11: #{teacher_net_forward.1} parent=5 // pred_region
        %s310 = ssub.s32 %s24, 1
        // Predicated region
        $region13: #{teacher_net_forward.1} parent=11 // pred_check
          %p311 = pneg %p71
        $region14: #{teacher_net_forward.1} parent=11 // pred_check_branch
          %313 = sbr.rel (%p311) target = $region16
        $region15: #{teacher_net_forward.1} parent=11 // pred_region
          _
        $region16: #{teacher_net_forward.1} parent=11 // pred_fallthru
          _
        // Predicated region
        $region17: #{teacher_net_forward.1} parent=11 // pred_check
          %p314 = pneg %p92
        $region18: #{teacher_net_forward.1} parent=11 // pred_check_branch
          %316 = sbr.rel (%p314) target = $region20
        $region19: #{teacher_net_forward.1} parent=11 // pred_region
          _
        $region20: #{teacher_net_forward.1} parent=11 // pred_fallthru
          _
        // Predicated region
        $region21: #{teacher_net_forward.1} parent=11 // pred_check
          %p317 = pneg %p113
        $region22: #{teacher_net_forward.1} parent=11 // pred_check_branch
          %319 = sbr.rel (%p317) target = $region24
        $region23: #{teacher_net_forward.1} parent=11 // pred_region
          _
        $region24: #{teacher_net_forward.1} parent=11 // pred_fallthru
          _
        // Predicated region
        $region25: #{teacher_net_forward.1} parent=11 // pred_check
          %p320 = pneg %p134
        $region26: #{teacher_net_forward.1} parent=11 // pred_check_branch
          %322 = sbr.rel (%p320) target = $region28
        $region27: #{teacher_net_forward.1} parent=11 // pred_region
          _
        $region28: #{teacher_net_forward.1} parent=11 // pred_fallthru
          _
        // Predicated region
        $region29: #{teacher_net_forward.1} parent=11 // pred_check
          %p323 = pneg %p155
        $region30: #{teacher_net_forward.1} parent=11 // pred_check_branch
          %325 = sbr.rel (%p323) target = $region32
        $region31: #{teacher_net_forward.1} parent=11 // pred_region
          _
        $region32: #{teacher_net_forward.1} parent=11 // pred_fallthru
          _
        // Predicated region
        $region33: #{teacher_net_forward.1} parent=11 // pred_check
          %p326 = pneg %p176
        $region34: #{teacher_net_forward.1} parent=11 // pred_check_branch
          %328 = sbr.rel (%p326) target = $region36
        $region35: #{teacher_net_forward.1} parent=11 // pred_region
          _
        $region36: #{teacher_net_forward.1} parent=11 // pred_fallthru
          _
        // Predicated region
        $region37: #{teacher_net_forward.1} parent=11 // pred_check
          %p329 = pneg %p197
        $region38: #{teacher_net_forward.1} parent=11 // pred_check_branch
          %331 = sbr.rel (%p329) target = $region40
        $region39: #{teacher_net_forward.1} parent=11 // pred_region
          _
        $region40: #{teacher_net_forward.1} parent=11 // pred_fallthru
          _
        // Predicated region
        $region41: #{teacher_net_forward.1} parent=11 // pred_check
          %p332 = pneg %p218
        $region42: #{teacher_net_forward.1} parent=11 // pred_check_branch
          %334 = sbr.rel (%p332) target = $region44
        $region43: #{teacher_net_forward.1} parent=11 // pred_region
          _
        $region44: #{teacher_net_forward.1} parent=11 // pred_fallthru
          _
      $region12: #{teacher_net_forward.1} parent=5 // pred_fallthru
        _
      %p335 = scmp.lt.s32.totalorder %s24, 2
      // Predicated region
      $region45: #{teacher_net_forward.1} parent=5 // pred_check
        %p336 = pneg %p335
      $region46: #{teacher_net_forward.1} parent=5 // pred_check_branch
        %338 = sbr.rel (%p336) target = $region48
      $region47: #{teacher_net_forward.1} parent=5 // pred_region
        // Predicated region
        $region49: #{teacher_net_forward.1} parent=47 // pred_check
          %p339 = pneg %p44
        $region50: #{teacher_net_forward.1} parent=47 // pred_check_branch
          %341 = sbr.rel (%p339) target = $region52
        $region51: #{teacher_net_forward.1} parent=47 // pred_region
          %p342 = scmp.lt.s32.totalorder %s24, 1
          %s343 = scalar_select %p342, %s24, 1
          %s344 = smul.addr %s343, 8
          %s345 = smul.addr %s344, 4
          %s346 = scalar_lea.vmem %s0, %s345
        $region52: #{teacher_net_forward.1} parent=47 // pred_fallthru
          _
      $region48: #{teacher_net_forward.1} parent=5 // pred_fallthru
        _
      %p347 = scmp.le.s32.totalorder 1, %s24
      %p348 = scmp.lt.s32.totalorder %s24, 3
      %p349 = pnand %p347, %p348
      %p350 = pneg %p349
      // Predicated region
      $region53: #{teacher_net_forward.1} parent=5 // pred_check
        _
      $region54: #{teacher_net_forward.1} parent=5 // pred_check_branch
        %352 = sbr.rel (%p349) target = $region56
      $region55: #{teacher_net_forward.1} parent=5 // pred_region
        %s353 = ssub.s32 %s24, 1
        %p354 = scmp.lt.s32.totalorder %s29, 1
        %s355 = scalar_select %p354, %s29, 1
        %s356 = smul.addr %s355, 8
        %s357 = smul.addr %s356, 4
        %s358 = scalar_lea.vmem %s0, %s357
        %p359 = pneg %p50
        %p360 = pneg %p47
        %p361 = pneg %p71
        %p362 = pneg %p68
        %p363 = pneg %p92
        %p364 = pneg %p89
        %p365 = pneg %p113
        %p366 = pneg %p110
        %p367 = pneg %p134
        %p368 = pneg %p131
        %p369 = pneg %p155
        %p370 = pneg %p152
        %p371 = pneg %p176
        %p372 = pneg %p173
        %p373 = pneg %p197
        %p374 = pneg %p194
        %p375 = pneg %p218
        %p376 = pneg %p215
        %p377 = pneg %p244
        %p378 = pneg %p241
        %p379 = scmp.lt.s32.totalorder %s29, 1
        %s380 = scalar_select %p379, %s29, 1
        %s381 = smul.addr %s380, 8
        %s382 = smul.addr %s381, 8
        %s383 = scalar_lea.vmem %s9, %s382
        %p384 = pneg %p270
        %p385 = pneg %p267
        %s386 = sand.u32 %s257, 1
        %s387 = scalar_lea.sflag [#allocation3], %s386
        %s388 = sand.u32 %s257, 1
        %s389 = smul.addr %s388, 16
        %s390 = scalar_lea.vmem [#allocation2], %s389
        %p391 = pneg %p296
        %p392 = pneg %p293
        %s393 = sand.u32 %s283, 1
        %s394 = scalar_lea.sflag [#allocation5], %s393
        %s395 = sand.u32 %s283, 1
        %s396 = smul.addr %s395, 4
        %s397 = scalar_lea.vmem [#allocation4], %s396
        %p398 = scmp.lt.s32.totalorder %s29, 1
        %s399 = scalar_select %p398, %s29, 1
        %s400 = smul.addr %s399, 8
        %s401 = smul.addr %s400, 4
        %s402 = scalar_lea.vmem %s0, %s401
        %p403 = scmp.lt.s32.totalorder %s29, 1
        %s404 = scalar_select %p403, %s29, 1
        %s405 = smul.addr %s404, 8
        %s406 = smul.addr %s405, 8
        %s407 = scalar_lea.vmem %s9, %s406
        %v409 = vld [vmem:[%s402] sm:$0xf]
        %v410 = vld [vmem:[%s402 + $0x4] sm:$0xf]
        %v411 = vld [vmem:[%s402 + $0x8] sm:$0xf]
        %v412 = vld [vmem:[%s402 + $0xc] sm:$0xf]
        %v413 = vld [vmem:[%s402 + $0x10] sm:$0xf]
        %v414 = vld [vmem:[%s402 + $0x14] sm:$0xf]
        %v415 = vld [vmem:[%s402 + $0x18] sm:$0xf]
        %v416 = vld [vmem:[%s402 + $0x1c] sm:$0xf]
        %v417 = vld [vmem:[%s1] sm:$0xf]
        %v418 = vld [vmem:[%s1 + $0x4] sm:$0xf]
        %v419 = vld [vmem:[%s1 + $0x8] sm:$0xf]
        %v420 = vld [vmem:[%s1 + $0xc] sm:$0xf]
        %v421 = vld [vmem:[%s1 + $0x10] sm:$0x3]
        %v422 = vld [vmem:[%s2] sm:$0x1]
        %v424 = vperm.slane %v422, 0
        %v434 = vunpack.c.l.b16 %v409
        %v435 = vunpack.c.l.b16 %v410
        %v436 = vunpack.c.l.b16 %v411
        %v437 = vunpack.c.l.b16 %v412
        %v438 = vunpack.c.l.b16 %v413
        %v439 = vunpack.c.l.b16 %v414
        %v440 = vunpack.c.l.b16 %v415
        %v441 = vunpack.c.l.b16 %v416
        %v442 = vpack.c.b16 %v435, %v434
        %v443 = vpack.c.b16 %v437, %v436
        %v444 = vpack.c.b16 %v439, %v438
        %v445 = vpack.c.b16 %v441, %v440
        %v451 = vunpack.c.l.b16 %v417
        %v452 = vunpack.c.l.b16 %v418
        %v453 = vunpack.c.l.b16 %v419
        %v454 = vunpack.c.l.b16 %v420
        %v455 = vunpack.c.l.b16 %v421
        %v456 = vpack.c.b16 %v452, %v451
        %v457 = vpack.c.b16 %v454, %v453
        %v458 = vpack.c.b16 %v455, %v455
        %vm461 = vcmask 293888
        %v463 = vsel %vm461, %v442, 0
        %v466 = vsel %vm461, %v443, 0
        %v469 = vsel %vm461, %v444, 0
        %v472 = vsel %vm461, %v445, 0
        %vm474 = vcmask 1041408
        %v476 = vsel %vm474, %v458, 0
        %478 = vmatpush.bf16.msra.mxu0 0
        %479 = vmatpush.bf16.msra.mxu0 0
        %480 = vmatpush.bf16.msra.mxu0 0
        %481 = vmatpush.bf16.msra.mxu0 0
        %482 = vmatpush.bf16.msra.mxu0 0
        %483 = vmatpush.bf16.msra.mxu0 %v476
        %484 = vmatpush.bf16.msra.mxu0 %v457
        %485 = vmatpush.bf16.msra.mxu0 %v456
        %486 = vmatmul.bf16.gmra.mxu0 %v463
        %v487 = vpop.f32.mrf.mxu0
        %v488 = vadd.f32 %v424, %v487
        %v489 = vpop.f32.mrf.mxu0
        %v490 = vadd.f32 %v424, %v489
        %491 = vmatmul.bf16.gmra.mxu0 %v466
        %v492 = vpop.f32.mrf.mxu0
        %v493 = vadd.f32 %v424, %v492
        %v494 = vpop.f32.mrf.mxu0
        %v495 = vadd.f32 %v424, %v494
        %496 = vmatmul.bf16.gmra.mxu0 %v469
        %v497 = vpop.f32.mrf.mxu0
        %v498 = vadd.f32 %v424, %v497
        %v499 = vpop.f32.mrf.mxu0
        %v500 = vadd.f32 %v424, %v499
        %501 = vmatmul.bf16.gmra.mxu0 %v472
        %v502 = vpop.f32.mrf.mxu0
        %v503 = vadd.f32 %v424, %v502
        %v504 = vpop.f32.mrf.mxu0
        %v505 = vadd.f32 %v424, %v504
        %506 = vdwg.mxu0
        %v507 = vmax.f32 %v488, 0.0
        %v508 = vmax.f32 %v490, 0.0
        %v509 = vmax.f32 %v493, 0.0
        %v510 = vmax.f32 %v495, 0.0
        %v511 = vmax.f32 %v498, 0.0
        %v512 = vmax.f32 %v500, 0.0
        %v513 = vmax.f32 %v503, 0.0
        %v514 = vmax.f32 %v505, 0.0
        %vm515 = vcmask 64512
        %516 = vst.msk [vmem:[%s407] sm:$0xff] %vm515, %v507
        %517 = vst.msk [vmem:[%s407 + $0x8] sm:$0xff] %vm515, %v508
        %518 = vst.msk [vmem:[%s407 + $0x10] sm:$0xff] %vm515, %v509
        %519 = vst.msk [vmem:[%s407 + $0x18] sm:$0xff] %vm515, %v510
        %520 = vst.msk [vmem:[%s407 + $0x20] sm:$0xff] %vm515, %v511
        %521 = vst.msk [vmem:[%s407 + $0x28] sm:$0xff] %vm515, %v512
        %522 = vst.msk [vmem:[%s407 + $0x30] sm:$0xff] %vm515, %v513
        %523 = vst.msk [vmem:[%s407 + $0x38] sm:$0xff] %vm515, %v514
        %v524 = vpack.c.bf16 %v508, %v507
        %v525 = vpack.c.bf16 %v510, %v509
        %v526 = vpack.c.bf16 %v512, %v511
        %v527 = vpack.c.bf16 %v514, %v513
        %v528 = vld [vmem:[%s3] sm:$0xf]
        %v529 = vld [vmem:[%s3 + $0x4] sm:$0xf]
        %v532 = vunpack.c.l.b16 %v528
        %v533 = vunpack.c.l.b16 %v529
        %v534 = vpack.c.b16 %v533, %v532
        %vm535 = vcmask 523264
        %v537 = vsel %vm535, %v534, 0
        %539 = vmatpush.bf16.msra.mxu0 0
        %540 = vmatpush.bf16.msra.mxu0 0
        %541 = vmatpush.bf16.msra.mxu0 0
        %542 = vmatpush.bf16.msra.mxu0 0
        %543 = vmatpush.bf16.msra.mxu0 %v527
        %544 = vmatpush.bf16.msra.mxu0 %v526
        %545 = vmatpush.bf16.msra.mxu0 %v525
        %546 = vmatpush.bf16.msra.mxu0 %v524
        %547 = vmatmul.bf16.gmra.mxu0 %v537
        %v548 = vpop.f32.mrf.mxu0
        %v549 = vadd.f32 0.0, %v548
        %v550 = vpop.f32.mrf.mxu0
        %v551 = vadd.f32 0.0, %v550
        %552 = vdwg.mxu0
        %v553 = vpack.c.bf16 %v551, %v549
        %v554 = vld [vmem:[%s4] sm:$0xf]
        %s555 = scalar_lea.vmem %s3, 8
        %v556 = vld [vmem:[%s555] sm:$0xf]
        %v557 = vld [vmem:[%s555 + $0x4] sm:$0xf]
        %v560 = vunpack.c.l.b16 %v556
        %v561 = vunpack.c.l.b16 %v557
        %v562 = vpack.c.b16 %v561, %v560
        %v564 = vsel %vm535, %v562, 0
        %566 = vmatpush.bf16.msra.mxu0 0
        %567 = vmatpush.bf16.msra.mxu0 0
        %568 = vmatpush.bf16.msra.mxu0 0
        %569 = vmatpush.bf16.msra.mxu0 0
        %570 = vmatpush.bf16.msra.mxu0 %v527
        %571 = vmatpush.bf16.msra.mxu0 %v526
        %572 = vmatpush.bf16.msra.mxu0 %v525
        %573 = vmatpush.bf16.msra.mxu0 %v524
        %574 = vmatmul.bf16.gmra.mxu0 %v564
        %v575 = vpop.f32.mrf.mxu0
        %v576 = vadd.f32 0.0, %v575
        %v577 = vpop.f32.mrf.mxu0
        %v578 = vadd.f32 0.0, %v577
        %579 = vdwg.mxu0
        %v580 = vpack.c.bf16 %v578, %v576
        %s581 = scalar_lea.vmem %s4, 4
        %v582 = vld [vmem:[%s581] sm:$0xf]
        %v584 = vsel %vm515, %v580, 0
        %vm586 = vcmask 1043456
        %v588 = vsel %vm586, %v582, 0
        %590 = vmatpush.bf16.msra.mxu0 0
        %591 = vmatpush.bf16.msra.mxu0 0
        %592 = vmatpush.bf16.msra.mxu0 0
        %593 = vmatpush.bf16.msra.mxu0 0
        %594 = vmatpush.bf16.msra.mxu0 0
        %595 = vmatpush.bf16.msra.mxu0 0
        %596 = vmatpush.bf16.msra.mxu0 0
        %597 = vmatpush.bf16.msra.mxu0 %v588
        %598 = vmatmul.bf16.gmra.mxu0 %v584
        %v599 = vpop.f32.mrf.mxu0
        %v600 = vadd.f32 0.0, %v599
        %v601 = vpop.f32.mrf.mxu0
        %v602 = vadd.f32 0.0, %v601
        %603 = vdwg.mxu0
        %v605 = vsel %vm515, %v553, 0
        %v608 = vsel %vm586, %v554, 0
        %610 = vmatpush.bf16.msra.mxu0 0
        %611 = vmatpush.bf16.msra.mxu0 0
        %612 = vmatpush.bf16.msra.mxu0 0
        %613 = vmatpush.bf16.msra.mxu0 0
        %614 = vmatpush.bf16.msra.mxu0 0
        %615 = vmatpush.bf16.msra.mxu0 0
        %616 = vmatpush.bf16.msra.mxu0 0
        %617 = vmatpush.bf16.msra.mxu0 %v608
        %618 = vmatmul.bf16.gmra.mxu0 %v605
        %v619 = vpop.f32.mrf.mxu0
        %v620 = vadd.f32 %v600, %v619
        %v621 = vpop.f32.mrf.mxu0
        %v622 = vadd.f32 %v602, %v621
        %623 = vdwg.mxu0
        %s624 = scalar_lea.vmem %s3, 16
        %v625 = vld [vmem:[%s624] sm:$0xf]
        %v626 = vld [vmem:[%s624 + $0x4] sm:$0xf]
        %v629 = vunpack.c.l.b16 %v625
        %v630 = vunpack.c.l.b16 %v626
        %v631 = vpack.c.b16 %v630, %v629
        %v633 = vsel %vm535, %v631, 0
        %635 = vmatpush.bf16.msra.mxu0 0
        %636 = vmatpush.bf16.msra.mxu0 0
        %637 = vmatpush.bf16.msra.mxu0 0
        %638 = vmatpush.bf16.msra.mxu0 0
        %639 = vmatpush.bf16.msra.mxu0 %v527
        %640 = vmatpush.bf16.msra.mxu0 %v526
        %641 = vmatpush.bf16.msra.mxu0 %v525
        %642 = vmatpush.bf16.msra.mxu0 %v524
        %643 = vmatmul.bf16.gmra.mxu0 %v633
        %v644 = vpop.f32.mrf.mxu0
        %v645 = vadd.f32 0.0, %v644
        %v646 = vpop.f32.mrf.mxu0
        %v647 = vadd.f32 0.0, %v646
        %648 = vdwg.mxu0
        %v649 = vpack.c.bf16 %v647, %v645
        %s650 = scalar_lea.vmem %s4, 8
        %v651 = vld [vmem:[%s650] sm:$0xf]
        %v653 = vsel %vm515, %v649, 0
        %v656 = vsel %vm586, %v651, 0
        %658 = vmatpush.bf16.msra.mxu0 0
        %659 = vmatpush.bf16.msra.mxu0 0
        %660 = vmatpush.bf16.msra.mxu0 0
        %661 = vmatpush.bf16.msra.mxu0 0
        %662 = vmatpush.bf16.msra.mxu0 0
        %663 = vmatpush.bf16.msra.mxu0 0
        %664 = vmatpush.bf16.msra.mxu0 0
        %665 = vmatpush.bf16.msra.mxu0 %v656
        %666 = vmatmul.bf16.gmra.mxu0 %v653
        %v667 = vpop.f32.mrf.mxu0
        %v668 = vadd.f32 0.0, %v667
        %v669 = vpop.f32.mrf.mxu0
        %v670 = vadd.f32 0.0, %v669
        %671 = vdwg.mxu0
        %v672 = vadd.f32 %v620, %v668
        %v673 = vadd.f32 %v622, %v670
        %s674 = scalar_lea.vmem %s3, 24
        %v675 = vld [vmem:[%s674] sm:$0xf]
        %v676 = vld [vmem:[%s674 + $0x4] sm:$0xf]
        %v679 = vunpack.c.l.b16 %v675
        %v680 = vunpack.c.l.b16 %v676
        %v681 = vpack.c.b16 %v680, %v679
        %v683 = vsel %vm535, %v681, 0
        %685 = vmatpush.bf16.msra.mxu0 0
        %686 = vmatpush.bf16.msra.mxu0 0
        %687 = vmatpush.bf16.msra.mxu0 0
        %688 = vmatpush.bf16.msra.mxu0 0
        %689 = vmatpush.bf16.msra.mxu0 %v527
        %690 = vmatpush.bf16.msra.mxu0 %v526
        %691 = vmatpush.bf16.msra.mxu0 %v525
        %692 = vmatpush.bf16.msra.mxu0 %v524
        %693 = vmatmul.bf16.gmra.mxu0 %v683
        %v694 = vpop.f32.mrf.mxu0
        %v695 = vadd.f32 0.0, %v694
        %v696 = vpop.f32.mrf.mxu0
        %v697 = vadd.f32 0.0, %v696
        %698 = vdwg.mxu0
        %v699 = vpack.c.bf16 %v697, %v695
        %s700 = scalar_lea.vmem %s4, 12
        %v701 = vld [vmem:[%s700] sm:$0xf]
        %v703 = vsel %vm515, %v699, 0
        %v706 = vsel %vm586, %v701, 0
        %708 = vmatpush.bf16.msra.mxu0 0
        %709 = vmatpush.bf16.msra.mxu0 0
        %710 = vmatpush.bf16.msra.mxu0 0
        %711 = vmatpush.bf16.msra.mxu0 0
        %712 = vmatpush.bf16.msra.mxu0 0
        %713 = vmatpush.bf16.msra.mxu0 0
        %714 = vmatpush.bf16.msra.mxu0 0
        %715 = vmatpush.bf16.msra.mxu0 %v706
        %716 = vmatmul.bf16.gmra.mxu0 %v703
        %v717 = vpop.f32.mrf.mxu0
        %v718 = vadd.f32 0.0, %v717
        %v719 = vpop.f32.mrf.mxu0
        %v720 = vadd.f32 0.0, %v719
        %721 = vdwg.mxu0
        %v722 = vadd.f32 %v672, %v718
        %v723 = vadd.f32 %v673, %v720
        %s724 = scalar_lea.vmem %s3, 32
        %v725 = vld [vmem:[%s724] sm:$0xf]
        %v726 = vld [vmem:[%s724 + $0x4] sm:$0xf]
        %v729 = vunpack.c.l.b16 %v725
        %v730 = vunpack.c.l.b16 %v726
        %v731 = vpack.c.b16 %v730, %v729
        %v733 = vsel %vm535, %v731, 0
        %735 = vmatpush.bf16.msra.mxu0 0
        %736 = vmatpush.bf16.msra.mxu0 0
        %737 = vmatpush.bf16.msra.mxu0 0
        %738 = vmatpush.bf16.msra.mxu0 0
        %739 = vmatpush.bf16.msra.mxu0 %v527
        %740 = vmatpush.bf16.msra.mxu0 %v526
        %741 = vmatpush.bf16.msra.mxu0 %v525
        %742 = vmatpush.bf16.msra.mxu0 %v524
        %743 = vmatmul.bf16.gmra.mxu0 %v733
        %v744 = vpop.f32.mrf.mxu0
        %v745 = vadd.f32 0.0, %v744
        %v746 = vpop.f32.mrf.mxu0
        %v747 = vadd.f32 0.0, %v746
        %748 = vdwg.mxu0
        %v749 = vpack.c.bf16 %v747, %v745
        %s750 = scalar_lea.vmem %s4, 16
        %v751 = vld [vmem:[%s750] sm:$0xf]
        %v753 = vsel %vm515, %v749, 0
        %v756 = vsel %vm586, %v751, 0
        %758 = vmatpush.bf16.msra.mxu0 0
        %759 = vmatpush.bf16.msra.mxu0 0
        %760 = vmatpush.bf16.msra.mxu0 0
        %761 = vmatpush.bf16.msra.mxu0 0
        %762 = vmatpush.bf16.msra.mxu0 0
        %763 = vmatpush.bf16.msra.mxu0 0
        %764 = vmatpush.bf16.msra.mxu0 0
        %765 = vmatpush.bf16.msra.mxu0 %v756
        %766 = vmatmul.bf16.gmra.mxu0 %v753
        %v767 = vpop.f32.mrf.mxu0
        %v768 = vadd.f32 0.0, %v767
        %v769 = vpop.f32.mrf.mxu0
        %v770 = vadd.f32 0.0, %v769
        %771 = vdwg.mxu0
        %v772 = vadd.f32 %v722, %v768
        %v773 = vadd.f32 %v723, %v770
        %s774 = scalar_lea.vmem %s3, 40
        %v775 = vld [vmem:[%s774] sm:$0xf]
        %v776 = vld [vmem:[%s774 + $0x4] sm:$0xf]
        %v779 = vunpack.c.l.b16 %v775
        %v780 = vunpack.c.l.b16 %v776
        %v781 = vpack.c.b16 %v780, %v779
        %v783 = vsel %vm535, %v781, 0
        %785 = vmatpush.bf16.msra.mxu0 0
        %786 = vmatpush.bf16.msra.mxu0 0
        %787 = vmatpush.bf16.msra.mxu0 0
        %788 = vmatpush.bf16.msra.mxu0 0
        %789 = vmatpush.bf16.msra.mxu0 %v527
        %790 = vmatpush.bf16.msra.mxu0 %v526
        %791 = vmatpush.bf16.msra.mxu0 %v525
        %792 = vmatpush.bf16.msra.mxu0 %v524
        %793 = vmatmul.bf16.gmra.mxu0 %v783
        %v794 = vpop.f32.mrf.mxu0
        %v795 = vadd.f32 0.0, %v794
        %v796 = vpop.f32.mrf.mxu0
        %v797 = vadd.f32 0.0, %v796
        %798 = vdwg.mxu0
        %v799 = vpack.c.bf16 %v797, %v795
        %s800 = scalar_lea.vmem %s4, 20
        %v801 = vld [vmem:[%s800] sm:$0xf]
        %v803 = vsel %vm515, %v799, 0
        %v806 = vsel %vm586, %v801, 0
        %808 = vmatpush.bf16.msra.mxu0 0
        %809 = vmatpush.bf16.msra.mxu0 0
        %810 = vmatpush.bf16.msra.mxu0 0
        %811 = vmatpush.bf16.msra.mxu0 0
        %812 = vmatpush.bf16.msra.mxu0 0
        %813 = vmatpush.bf16.msra.mxu0 0
        %814 = vmatpush.bf16.msra.mxu0 0
        %815 = vmatpush.bf16.msra.mxu0 %v806
        %816 = vmatmul.bf16.gmra.mxu0 %v803
        %v817 = vpop.f32.mrf.mxu0
        %v818 = vadd.f32 0.0, %v817
        %v819 = vpop.f32.mrf.mxu0
        %v820 = vadd.f32 0.0, %v819
        %821 = vdwg.mxu0
        %v822 = vadd.f32 %v772, %v818
        %v823 = vadd.f32 %v773, %v820
        %s824 = scalar_lea.vmem %s3, 48
        %v825 = vld [vmem:[%s824] sm:$0xf]
        %v826 = vld [vmem:[%s824 + $0x4] sm:$0xf]
        %v829 = vunpack.c.l.b16 %v825
        %v830 = vunpack.c.l.b16 %v826
        %v831 = vpack.c.b16 %v830, %v829
        %v833 = vsel %vm535, %v831, 0
        %835 = vmatpush.bf16.msra.mxu0 0
        %836 = vmatpush.bf16.msra.mxu0 0
        %837 = vmatpush.bf16.msra.mxu0 0
        %838 = vmatpush.bf16.msra.mxu0 0
        %839 = vmatpush.bf16.msra.mxu0 %v527
        %840 = vmatpush.bf16.msra.mxu0 %v526
        %841 = vmatpush.bf16.msra.mxu0 %v525
        %842 = vmatpush.bf16.msra.mxu0 %v524
        %843 = vmatmul.bf16.gmra.mxu0 %v833
        %v844 = vpop.f32.mrf.mxu0
        %v845 = vadd.f32 0.0, %v844
        %v846 = vpop.f32.mrf.mxu0
        %v847 = vadd.f32 0.0, %v846
        %848 = vdwg.mxu0
        %v849 = vpack.c.bf16 %v847, %v845
        %s850 = scalar_lea.vmem %s4, 24
        %v851 = vld [vmem:[%s850] sm:$0xf]
        %v853 = vsel %vm515, %v849, 0
        %v856 = vsel %vm586, %v851, 0
        %858 = vmatpush.bf16.msra.mxu0 0
        %859 = vmatpush.bf16.msra.mxu0 0
        %860 = vmatpush.bf16.msra.mxu0 0
        %861 = vmatpush.bf16.msra.mxu0 0
        %862 = vmatpush.bf16.msra.mxu0 0
        %863 = vmatpush.bf16.msra.mxu0 0
        %864 = vmatpush.bf16.msra.mxu0 0
        %865 = vmatpush.bf16.msra.mxu0 %v856
        %866 = vmatmul.bf16.gmra.mxu0 %v853
        %v867 = vpop.f32.mrf.mxu0
        %v868 = vadd.f32 0.0, %v867
        %v869 = vpop.f32.mrf.mxu0
        %v870 = vadd.f32 0.0, %v869
        %871 = vdwg.mxu0
        %v872 = vadd.f32 %v822, %v868
        %v873 = vadd.f32 %v823, %v870
        %s874 = scalar_lea.vmem %s3, 56
        %v875 = vld [vmem:[%s874] sm:$0xf]
        %v876 = vld [vmem:[%s874 + $0x4] sm:$0xf]
        %v879 = vunpack.c.l.b16 %v875
        %v880 = vunpack.c.l.b16 %v876
        %v881 = vpack.c.b16 %v880, %v879
        %v883 = vsel %vm535, %v881, 0
        %885 = vmatpush.bf16.msra.mxu0 0
        %886 = vmatpush.bf16.msra.mxu0 0
        %887 = vmatpush.bf16.msra.mxu0 0
        %888 = vmatpush.bf16.msra.mxu0 0
        %889 = vmatpush.bf16.msra.mxu0 %v527
        %890 = vmatpush.bf16.msra.mxu0 %v526
        %891 = vmatpush.bf16.msra.mxu0 %v525
        %892 = vmatpush.bf16.msra.mxu0 %v524
        %893 = vmatmul.bf16.gmra.mxu0 %v883
        %v894 = vpop.f32.mrf.mxu0
        %v895 = vadd.f32 0.0, %v894
        %v896 = vpop.f32.mrf.mxu0
        %v897 = vadd.f32 0.0, %v896
        %898 = vdwg.mxu0
        %v899 = vpack.c.bf16 %v897, %v895
        %s900 = scalar_lea.vmem %s4, 28
        %v901 = vld [vmem:[%s900] sm:$0xf]
        %v903 = vsel %vm515, %v899, 0
        %v906 = vsel %vm586, %v901, 0
        %908 = vmatpush.bf16.msra.mxu0 0
        %909 = vmatpush.bf16.msra.mxu0 0
        %910 = vmatpush.bf16.msra.mxu0 0
        %911 = vmatpush.bf16.msra.mxu0 0
        %912 = vmatpush.bf16.msra.mxu0 0
        %913 = vmatpush.bf16.msra.mxu0 0
        %914 = vmatpush.bf16.msra.mxu0 0
        %915 = vmatpush.bf16.msra.mxu0 %v906
        %916 = vmatmul.bf16.gmra.mxu0 %v903
        %v917 = vpop.f32.mrf.mxu0
        %v918 = vadd.f32 0.0, %v917
        %v919 = vpop.f32.mrf.mxu0
        %v920 = vadd.f32 0.0, %v919
        %921 = vdwg.mxu0
        %v922 = vadd.f32 %v872, %v918
        %v923 = vadd.f32 %v873, %v920
        %s924 = scalar_lea.vmem %s3, 64
        %v925 = vld [vmem:[%s924] sm:$0xf]
        %v926 = vld [vmem:[%s924 + $0x4] sm:$0xf]
        %v929 = vunpack.c.l.b16 %v925
        %v930 = vunpack.c.l.b16 %v926
        %v931 = vpack.c.b16 %v930, %v929
        %v933 = vsel %vm535, %v931, 0
        %935 = vmatpush.bf16.msra.mxu0 0
        %936 = vmatpush.bf16.msra.mxu0 0
        %937 = vmatpush.bf16.msra.mxu0 0
        %938 = vmatpush.bf16.msra.mxu0 0
        %939 = vmatpush.bf16.msra.mxu0 %v527
        %940 = vmatpush.bf16.msra.mxu0 %v526
        %941 = vmatpush.bf16.msra.mxu0 %v525
        %942 = vmatpush.bf16.msra.mxu0 %v524
        %943 = vmatmul.bf16.gmra.mxu0 %v933
        %v944 = vpop.f32.mrf.mxu0
        %v945 = vadd.f32 0.0, %v944
        %v946 = vpop.f32.mrf.mxu0
        %v947 = vadd.f32 0.0, %v946
        %948 = vdwg.mxu0
        %v949 = vpack.c.bf16 %v947, %v945
        %s950 = scalar_lea.vmem %s4, 32
        %v951 = vld [vmem:[%s950] sm:$0xf]
        %v953 = vsel %vm515, %v949, 0
        %v956 = vsel %vm586, %v951, 0
        %958 = vmatpush.bf16.msra.mxu0 0
        %959 = vmatpush.bf16.msra.mxu0 0
        %960 = vmatpush.bf16.msra.mxu0 0
        %961 = vmatpush.bf16.msra.mxu0 0
        %962 = vmatpush.bf16.msra.mxu0 0
        %963 = vmatpush.bf16.msra.mxu0 0
        %964 = vmatpush.bf16.msra.mxu0 0
        %965 = vmatpush.bf16.msra.mxu0 %v956
        %966 = vmatmul.bf16.gmra.mxu0 %v953
        %v967 = vpop.f32.mrf.mxu0
        %v968 = vadd.f32 0.0, %v967
        %v969 = vpop.f32.mrf.mxu0
        %v970 = vadd.f32 0.0, %v969
        %971 = vdwg.mxu0
        %v972 = vadd.f32 %v922, %v968
        %v973 = vadd.f32 %v923, %v970
        %v974 = vld [vmem:[%s5] sm:$0x1]
        %v976 = vperm.slane %v974, 0
        %v978 = vadd.f32 %v972, %v976
        %v979 = vadd.f32 %v973, %v976
        %v980 = vmax.f32 %v978, 0.0
        %v981 = vmax.f32 %v979, 0.0
        %vm982 = vcmask 130048
        %983 = vst.msk [vmem:[%s390] sm:$0xff] %vm982, %v980
        %984 = vst.msk [vmem:[%s390 + $0x8] sm:$0xff] %vm982, %v981
        %v985 = vpack.c.bf16 %v981, %v980
        %v986 = vld [vmem:[%s6] sm:$0x3]
        %v988 = vsel %vm982, %v986, 0
        %990 = vmatpush.bf16.msra.mxu0 0
        %991 = vmatpush.bf16.msra.mxu0 0
        %992 = vmatpush.bf16.msra.mxu0 0
        %993 = vmatpush.bf16.msra.mxu0 0
        %994 = vmatpush.bf16.msra.mxu0 0
        %995 = vmatpush.bf16.msra.mxu0 0
        %996 = vmatpush.bf16.msra.mxu0 0
        %997 = vmatpush.bf16.msra.mxu0 %v985
        %998 = vmatmul.bf16.gmra.mxu0 %v988
        %v999 = vpop.f32.mrf.mxu0
        %v1000 = vadd.f32 0.0, %v999
        %v1001 = vpop.f32.mrf.mxu0
        %1002 = vdwg.mxu0
        %v1003 = vpack.c.bf16 %v1000, %v1000
        %v1004 = vld [vmem:[%s7] sm:$0xf]
        %v1005 = vld [vmem:[%s7 + $0x4] sm:$0xf]
        %s1006 = scalar_lea.vmem %s6, 2
        %v1007 = vld [vmem:[%s1006] sm:$0x3]
        %v1009 = vsel %vm982, %v1007, 0
        %1011 = vmatpush.bf16.msra.mxu0 0
        %1012 = vmatpush.bf16.msra.mxu0 0
        %1013 = vmatpush.bf16.msra.mxu0 0
        %1014 = vmatpush.bf16.msra.mxu0 0
        %1015 = vmatpush.bf16.msra.mxu0 0
        %1016 = vmatpush.bf16.msra.mxu0 0
        %1017 = vmatpush.bf16.msra.mxu0 0
        %1018 = vmatpush.bf16.msra.mxu0 %v985
        %1019 = vmatmul.bf16.gmra.mxu0 %v1009
        %v1020 = vpop.f32.mrf.mxu0
        %v1021 = vadd.f32 0.0, %v1020
        %v1022 = vpop.f32.mrf.mxu0
        %1023 = vdwg.mxu0
        %v1024 = vpack.c.bf16 %v1021, %v1021
        %s1025 = scalar_lea.vmem %s7, 8
        %v1026 = vld [vmem:[%s1025] sm:$0xf]
        %v1027 = vld [vmem:[%s1025 + $0x4] sm:$0xf]
        %v1030 = vunpack.c.l.b16 %v1026
        %v1031 = vunpack.c.l.b16 %v1027
        %v1032 = vpack.c.b16 %v1031, %v1030
        %v1035 = vsel %vm982, %v1024, 0
        %1037 = vmatpush.bf16.msra.mxu0 0
        %1038 = vmatpush.bf16.msra.mxu0 0
        %1039 = vmatpush.bf16.msra.mxu0 0
        %1040 = vmatpush.bf16.msra.mxu0 0
        %1041 = vmatpush.bf16.msra.mxu0 0
        %1042 = vmatpush.bf16.msra.mxu0 0
        %1043 = vmatpush.bf16.msra.mxu0 0
        %1044 = vmatpush.bf16.msra.mxu0 %v1032
        %1045 = vmatmul.bf16.gmra.mxu0 %v1035
        %v1046 = vpop.f32.mrf.mxu0
        %v1047 = vadd.f32 0.0, %v1046
        %v1048 = vpop.f32.mrf.mxu0
        %1049 = vdwg.mxu0
        %v1052 = vunpack.c.l.b16 %v1004
        %v1053 = vunpack.c.l.b16 %v1005
        %v1054 = vpack.c.b16 %v1053, %v1052
        %v1057 = vsel %vm982, %v1003, 0
        %1059 = vmatpush.bf16.msra.mxu0 0
        %1060 = vmatpush.bf16.msra.mxu0 0
        %1061 = vmatpush.bf16.msra.mxu0 0
        %1062 = vmatpush.bf16.msra.mxu0 0
        %1063 = vmatpush.bf16.msra.mxu0 0
        %1064 = vmatpush.bf16.msra.mxu0 0
        %1065 = vmatpush.bf16.msra.mxu0 0
        %1066 = vmatpush.bf16.msra.mxu0 %v1054
        %1067 = vmatmul.bf16.gmra.mxu0 %v1057
        %v1068 = vpop.f32.mrf.mxu0
        %v1069 = vadd.f32 %v1047, %v1068
        %v1070 = vpop.f32.mrf.mxu0
        %1071 = vdwg.mxu0
        %s1072 = scalar_lea.vmem %s6, 4
        %v1073 = vld [vmem:[%s1072] sm:$0x3]
        %v1075 = vsel %vm982, %v1073, 0
        %1077 = vmatpush.bf16.msra.mxu0 0
        %1078 = vmatpush.bf16.msra.mxu0 0
        %1079 = vmatpush.bf16.msra.mxu0 0
        %1080 = vmatpush.bf16.msra.mxu0 0
        %1081 = vmatpush.bf16.msra.mxu0 0
        %1082 = vmatpush.bf16.msra.mxu0 0
        %1083 = vmatpush.bf16.msra.mxu0 0
        %1084 = vmatpush.bf16.msra.mxu0 %v985
        %1085 = vmatmul.bf16.gmra.mxu0 %v1075
        %v1086 = vpop.f32.mrf.mxu0
        %v1087 = vadd.f32 0.0, %v1086
        %v1088 = vpop.f32.mrf.mxu0
        %1089 = vdwg.mxu0
        %v1090 = vpack.c.bf16 %v1087, %v1087
        %s1091 = scalar_lea.vmem %s7, 16
        %v1092 = vld [vmem:[%s1091] sm:$0xf]
        %v1093 = vld [vmem:[%s1091 + $0x4] sm:$0xf]
        %v1096 = vunpack.c.l.b16 %v1092
        %v1097 = vunpack.c.l.b16 %v1093
        %v1098 = vpack.c.b16 %v1097, %v1096
        %v1101 = vsel %vm982, %v1090, 0
        %1103 = vmatpush.bf16.msra.mxu0 0
        %1104 = vmatpush.bf16.msra.mxu0 0
        %1105 = vmatpush.bf16.msra.mxu0 0
        %1106 = vmatpush.bf16.msra.mxu0 0
        %1107 = vmatpush.bf16.msra.mxu0 0
        %1108 = vmatpush.bf16.msra.mxu0 0
        %1109 = vmatpush.bf16.msra.mxu0 0
        %1110 = vmatpush.bf16.msra.mxu0 %v1098
        %1111 = vmatmul.bf16.gmra.mxu0 %v1101
        %v1112 = vpop.f32.mrf.mxu0
        %v1113 = vadd.f32 0.0, %v1112
        %v1114 = vpop.f32.mrf.mxu0
        %1115 = vdwg.mxu0
        %v1116 = vadd.f32 %v1069, %v1113
        %s1117 = scalar_lea.vmem %s6, 6
        %v1118 = vld [vmem:[%s1117] sm:$0x3]
        %v1120 = vsel %vm982, %v1118, 0
        %1122 = vmatpush.bf16.msra.mxu0 0
        %1123 = vmatpush.bf16.msra.mxu0 0
        %1124 = vmatpush.bf16.msra.mxu0 0
        %1125 = vmatpush.bf16.msra.mxu0 0
        %1126 = vmatpush.bf16.msra.mxu0 0
        %1127 = vmatpush.bf16.msra.mxu0 0
        %1128 = vmatpush.bf16.msra.mxu0 0
        %1129 = vmatpush.bf16.msra.mxu0 %v985
        %1130 = vmatmul.bf16.gmra.mxu0 %v1120
        %v1131 = vpop.f32.mrf.mxu0
        %v1132 = vadd.f32 0.0, %v1131
        %v1133 = vpop.f32.mrf.mxu0
        %1134 = vdwg.mxu0
        %v1135 = vpack.c.bf16 %v1132, %v1132
        %s1136 = scalar_lea.vmem %s7, 24
        %v1137 = vld [vmem:[%s1136] sm:$0xf]
        %v1138 = vld [vmem:[%s1136 + $0x4] sm:$0xf]
        %v1141 = vunpack.c.l.b16 %v1137
        %v1142 = vunpack.c.l.b16 %v1138
        %v1143 = vpack.c.b16 %v1142, %v1141
        %v1146 = vsel %vm982, %v1135, 0
        %1148 = vmatpush.bf16.msra.mxu0 0
        %1149 = vmatpush.bf16.msra.mxu0 0
        %1150 = vmatpush.bf16.msra.mxu0 0
        %1151 = vmatpush.bf16.msra.mxu0 0
        %1152 = vmatpush.bf16.msra.mxu0 0
        %1153 = vmatpush.bf16.msra.mxu0 0
        %1154 = vmatpush.bf16.msra.mxu0 0
        %1155 = vmatpush.bf16.msra.mxu0 %v1143
        %1156 = vmatmul.bf16.gmra.mxu0 %v1146
        %v1157 = vpop.f32.mrf.mxu0
        %v1158 = vadd.f32 0.0, %v1157
        %v1159 = vpop.f32.mrf.mxu0
        %1160 = vdwg.mxu0
        %v1161 = vadd.f32 %v1116, %v1158
        %s1162 = scalar_lea.vmem %s6, 8
        %v1163 = vld [vmem:[%s1162] sm:$0x3]
        %v1165 = vsel %vm982, %v1163, 0
        %1167 = vmatpush.bf16.msra.mxu0 0
        %1168 = vmatpush.bf16.msra.mxu0 0
        %1169 = vmatpush.bf16.msra.mxu0 0
        %1170 = vmatpush.bf16.msra.mxu0 0
        %1171 = vmatpush.bf16.msra.mxu0 0
        %1172 = vmatpush.bf16.msra.mxu0 0
        %1173 = vmatpush.bf16.msra.mxu0 0
        %1174 = vmatpush.bf16.msra.mxu0 %v985
        %1175 = vmatmul.bf16.gmra.mxu0 %v1165
        %v1176 = vpop.f32.mrf.mxu0
        %v1177 = vadd.f32 0.0, %v1176
        %v1178 = vpop.f32.mrf.mxu0
        %1179 = vdwg.mxu0
        %v1180 = vpack.c.bf16 %v1177, %v1177
        %s1181 = scalar_lea.vmem %s7, 32
        %v1182 = vld [vmem:[%s1181] sm:$0xf]
        %v1183 = vld [vmem:[%s1181 + $0x4] sm:$0xf]
        %v1186 = vunpack.c.l.b16 %v1182
        %v1187 = vunpack.c.l.b16 %v1183
        %v1188 = vpack.c.b16 %v1187, %v1186
        %v1191 = vsel %vm982, %v1180, 0
        %1193 = vmatpush.bf16.msra.mxu0 0
        %1194 = vmatpush.bf16.msra.mxu0 0
        %1195 = vmatpush.bf16.msra.mxu0 0
        %1196 = vmatpush.bf16.msra.mxu0 0
        %1197 = vmatpush.bf16.msra.mxu0 0
        %1198 = vmatpush.bf16.msra.mxu0 0
        %1199 = vmatpush.bf16.msra.mxu0 0
        %1200 = vmatpush.bf16.msra.mxu0 %v1188
        %1201 = vmatmul.bf16.gmra.mxu0 %v1191
        %v1202 = vpop.f32.mrf.mxu0
        %v1203 = vadd.f32 0.0, %v1202
        %v1204 = vpop.f32.mrf.mxu0
        %1205 = vdwg.mxu0
        %v1206 = vadd.f32 %v1161, %v1203
        %s1207 = scalar_lea.vmem %s6, 10
        %v1208 = vld [vmem:[%s1207] sm:$0x3]
        %v1210 = vsel %vm982, %v1208, 0
        %1212 = vmatpush.bf16.msra.mxu0 0
        %1213 = vmatpush.bf16.msra.mxu0 0
        %1214 = vmatpush.bf16.msra.mxu0 0
        %1215 = vmatpush.bf16.msra.mxu0 0
        %1216 = vmatpush.bf16.msra.mxu0 0
        %1217 = vmatpush.bf16.msra.mxu0 0
        %1218 = vmatpush.bf16.msra.mxu0 0
        %1219 = vmatpush.bf16.msra.mxu0 %v985
        %1220 = vmatmul.bf16.gmra.mxu0 %v1210
        %v1221 = vpop.f32.mrf.mxu0
        %v1222 = vadd.f32 0.0, %v1221
        %v1223 = vpop.f32.mrf.mxu0
        %1224 = vdwg.mxu0
        %v1225 = vpack.c.bf16 %v1222, %v1222
        %s1226 = scalar_lea.vmem %s7, 40
        %v1227 = vld [vmem:[%s1226] sm:$0xf]
        %v1228 = vld [vmem:[%s1226 + $0x4] sm:$0xf]
        %v1231 = vunpack.c.l.b16 %v1227
        %v1232 = vunpack.c.l.b16 %v1228
        %v1233 = vpack.c.b16 %v1232, %v1231
        %v1236 = vsel %vm982, %v1225, 0
        %1238 = vmatpush.bf16.msra.mxu0 0
        %1239 = vmatpush.bf16.msra.mxu0 0
        %1240 = vmatpush.bf16.msra.mxu0 0
        %1241 = vmatpush.bf16.msra.mxu0 0
        %1242 = vmatpush.bf16.msra.mxu0 0
        %1243 = vmatpush.bf16.msra.mxu0 0
        %1244 = vmatpush.bf16.msra.mxu0 0
        %1245 = vmatpush.bf16.msra.mxu0 %v1233
        %1246 = vmatmul.bf16.gmra.mxu0 %v1236
        %v1247 = vpop.f32.mrf.mxu0
        %v1248 = vadd.f32 0.0, %v1247
        %v1249 = vpop.f32.mrf.mxu0
        %1250 = vdwg.mxu0
        %v1251 = vadd.f32 %v1206, %v1248
        %s1252 = scalar_lea.vmem %s6, 12
        %v1253 = vld [vmem:[%s1252] sm:$0x3]
        %v1255 = vsel %vm982, %v1253, 0
        %1257 = vmatpush.bf16.msra.mxu0 0
        %1258 = vmatpush.bf16.msra.mxu0 0
        %1259 = vmatpush.bf16.msra.mxu0 0
        %1260 = vmatpush.bf16.msra.mxu0 0
        %1261 = vmatpush.bf16.msra.mxu0 0
        %1262 = vmatpush.bf16.msra.mxu0 0
        %1263 = vmatpush.bf16.msra.mxu0 0
        %1264 = vmatpush.bf16.msra.mxu0 %v985
        %1265 = vmatmul.bf16.gmra.mxu0 %v1255
        %v1266 = vpop.f32.mrf.mxu0
        %v1267 = vadd.f32 0.0, %v1266
        %v1268 = vpop.f32.mrf.mxu0
        %1269 = vdwg.mxu0
        %v1270 = vpack.c.bf16 %v1267, %v1267
        %s1271 = scalar_lea.vmem %s7, 48
        %v1272 = vld [vmem:[%s1271] sm:$0xf]
        %v1273 = vld [vmem:[%s1271 + $0x4] sm:$0xf]
        %v1276 = vunpack.c.l.b16 %v1272
        %v1277 = vunpack.c.l.b16 %v1273
        %v1278 = vpack.c.b16 %v1277, %v1276
        %v1281 = vsel %vm982, %v1270, 0
        %1283 = vmatpush.bf16.msra.mxu0 0
        %1284 = vmatpush.bf16.msra.mxu0 0
        %1285 = vmatpush.bf16.msra.mxu0 0
        %1286 = vmatpush.bf16.msra.mxu0 0
        %1287 = vmatpush.bf16.msra.mxu0 0
        %1288 = vmatpush.bf16.msra.mxu0 0
        %1289 = vmatpush.bf16.msra.mxu0 0
        %1290 = vmatpush.bf16.msra.mxu0 %v1278
        %1291 = vmatmul.bf16.gmra.mxu0 %v1281
        %v1292 = vpop.f32.mrf.mxu0
        %v1293 = vadd.f32 0.0, %v1292
        %v1294 = vpop.f32.mrf.mxu0
        %1295 = vdwg.mxu0
        %v1296 = vadd.f32 %v1251, %v1293
        %s1297 = scalar_lea.vmem %s6, 14
        %v1298 = vld [vmem:[%s1297] sm:$0x3]
        %v1300 = vsel %vm982, %v1298, 0
        %1302 = vmatpush.bf16.msra.mxu0 0
        %1303 = vmatpush.bf16.msra.mxu0 0
        %1304 = vmatpush.bf16.msra.mxu0 0
        %1305 = vmatpush.bf16.msra.mxu0 0
        %1306 = vmatpush.bf16.msra.mxu0 0
        %1307 = vmatpush.bf16.msra.mxu0 0
        %1308 = vmatpush.bf16.msra.mxu0 0
        %1309 = vmatpush.bf16.msra.mxu0 %v985
        %1310 = vmatmul.bf16.gmra.mxu0 %v1300
        %v1311 = vpop.f32.mrf.mxu0
        %v1312 = vadd.f32 0.0, %v1311
        %v1313 = vpop.f32.mrf.mxu0
        %1314 = vdwg.mxu0
        %v1315 = vpack.c.bf16 %v1312, %v1312
        %s1316 = scalar_lea.vmem %s7, 56
        %v1317 = vld [vmem:[%s1316] sm:$0xf]
        %v1318 = vld [vmem:[%s1316 + $0x4] sm:$0xf]
        %v1321 = vunpack.c.l.b16 %v1317
        %v1322 = vunpack.c.l.b16 %v1318
        %v1323 = vpack.c.b16 %v1322, %v1321
        %v1326 = vsel %vm982, %v1315, 0
        %1328 = vmatpush.bf16.msra.mxu0 0
        %1329 = vmatpush.bf16.msra.mxu0 0
        %1330 = vmatpush.bf16.msra.mxu0 0
        %1331 = vmatpush.bf16.msra.mxu0 0
        %1332 = vmatpush.bf16.msra.mxu0 0
        %1333 = vmatpush.bf16.msra.mxu0 0
        %1334 = vmatpush.bf16.msra.mxu0 0
        %1335 = vmatpush.bf16.msra.mxu0 %v1323
        %1336 = vmatmul.bf16.gmra.mxu0 %v1326
        %v1337 = vpop.f32.mrf.mxu0
        %v1338 = vadd.f32 0.0, %v1337
        %v1339 = vpop.f32.mrf.mxu0
        %1340 = vdwg.mxu0
        %v1341 = vadd.f32 %v1296, %v1338
        %s1342 = scalar_lea.vmem %s6, 16
        %v1343 = vld [vmem:[%s1342] sm:$0x3]
        %v1345 = vsel %vm982, %v1343, 0
        %1347 = vmatpush.bf16.msra.mxu0 0
        %1348 = vmatpush.bf16.msra.mxu0 0
        %1349 = vmatpush.bf16.msra.mxu0 0
        %1350 = vmatpush.bf16.msra.mxu0 0
        %1351 = vmatpush.bf16.msra.mxu0 0
        %1352 = vmatpush.bf16.msra.mxu0 0
        %1353 = vmatpush.bf16.msra.mxu0 0
        %1354 = vmatpush.bf16.msra.mxu0 %v985
        %1355 = vmatmul.bf16.gmra.mxu0 %v1345
        %v1356 = vpop.f32.mrf.mxu0
        %v1357 = vadd.f32 0.0, %v1356
        %v1358 = vpop.f32.mrf.mxu0
        %1359 = vdwg.mxu0
        %v1360 = vpack.c.bf16 %v1357, %v1357
        %s1361 = scalar_lea.vmem %s7, 64
        %v1362 = vld [vmem:[%s1361] sm:$0xf]
        %v1363 = vld [vmem:[%s1361 + $0x4] sm:$0xf]
        %v1366 = vunpack.c.l.b16 %v1362
        %v1367 = vunpack.c.l.b16 %v1363
        %v1368 = vpack.c.b16 %v1367, %v1366
        %v1371 = vsel %vm982, %v1360, 0
        %1373 = vmatpush.bf16.msra.mxu0 0
        %1374 = vmatpush.bf16.msra.mxu0 0
        %1375 = vmatpush.bf16.msra.mxu0 0
        %1376 = vmatpush.bf16.msra.mxu0 0
        %1377 = vmatpush.bf16.msra.mxu0 0
        %1378 = vmatpush.bf16.msra.mxu0 0
        %1379 = vmatpush.bf16.msra.mxu0 0
        %1380 = vmatpush.bf16.msra.mxu0 %v1368
        %1381 = vmatmul.bf16.gmra.mxu0 %v1371
        %v1382 = vpop.f32.mrf.mxu0
        %v1383 = vadd.f32 0.0, %v1382
        %v1384 = vpop.f32.mrf.mxu0
        %1385 = vdwg.mxu0
        %v1386 = vadd.f32 %v1341, %v1383
        %v1387 = vld [vmem:[%s8] sm:$0x1]
        %v1389 = vperm.slane %v1387, 0
        %v1391 = vadd.f32 %v1386, %v1389
        %v1392 = vmax.f32 %v1391, 0.0
        %vm1393 = vcmask 257024
        %1394 = vst.msk [vmem:[%s397] sm:$0xf] %vm1393, %v1392
        %p1395 = scmp.lt.s32.totalorder %s29, 1
        %s1396 = scalar_select %p1395, %s29, 1
        %s1397 = smul.addr %s1396, 8
        %s1398 = smul.addr %s1397, 8
        %s1399 = scalar_lea.vmem %s9, %s1398
        %s1400 = sand.u32 %s257, 1
        %s1401 = scalar_lea.sflag [#allocation3], %s1400
        %s1402 = sand.u32 %s257, 1
        %s1403 = smul.addr %s1402, 16
        %s1404 = scalar_lea.vmem [#allocation2], %s1403
        %s1405 = sand.u32 %s283, 1
        %s1406 = scalar_lea.sflag [#allocation5], %s1405
        %s1407 = sand.u32 %s283, 1
        %s1408 = smul.addr %s1407, 4
        %s1409 = scalar_lea.vmem [#allocation4], %s1408
        // Predicated region
        $region57: #{teacher_net_forward.1} parent=55 // pred_check
          %p1410 = pneg %p241
        $region58: #{teacher_net_forward.1} parent=55 // pred_check_branch
          %1412 = sbr.rel (%p1410) target = $region60
        $region59: #{teacher_net_forward.1} parent=55 // pred_region
          _
        $region60: #{teacher_net_forward.1} parent=55 // pred_fallthru
          _
        // Predicated region
        $region61: #{teacher_net_forward.1} parent=55 // pred_check
          %p1413 = pneg %p267
        $region62: #{teacher_net_forward.1} parent=55 // pred_check_branch
          %1415 = sbr.rel (%p1413) target = $region64
        $region63: #{teacher_net_forward.1} parent=55 // pred_region
          %1417 = vsyncadd %s1401, 0
          %s1418 = smul.addr %s29, 2
          %s1419 = smul.addr %s1418, 8
          %s1420 = scalar_lea.hbm %s10, %s1419
          %s1421 = sshll.u32 %s1404, 4
          %s1422 = int_to_ptr.vmem [resolvable:$true] %s1421
          %s1423 = sshll.u32 %s1420, 4
          %s1424 = int_to_ptr.hbm [resolvable:$true] %s1423
          %1429 = dma.vmem_to_hbm [thread:$0]  %s1422, 256, %s1424, %s1401, 128, 128, 8
        $region64: #{teacher_net_forward.1} parent=55 // pred_fallthru
          _
        // Predicated region
        $region65: #{teacher_net_forward.1} parent=55 // pred_check
          %p1430 = pneg %p293
        $region66: #{teacher_net_forward.1} parent=55 // pred_check_branch
          %1432 = sbr.rel (%p1430) target = $region68
        $region67: #{teacher_net_forward.1} parent=55 // pred_region
          %1434 = vsyncadd %s1406, 0
          %s1435 = smul.addr %s29, 4
          %s1436 = scalar_lea.hbm %s11, %s1435
          %s1438 = sshll.u32 %s1409, 4
          %s1439 = int_to_ptr.vmem [resolvable:$true] %s1438
          %s1440 = sshll.u32 %s1436, 4
          %s1441 = int_to_ptr.hbm [resolvable:$true] %s1440
          %1443 = dma.vmem_to_hbm [thread:$0]  %s1439, 64, %s1441, %s1406
        $region68: #{teacher_net_forward.1} parent=55 // pred_fallthru
          _
      $region56: #{teacher_net_forward.1} parent=5 // pred_fallthru
        _
      %p1444 = scmp.le.s32.totalorder 2, %s24
      // Predicated region
      $region69: #{teacher_net_forward.1} parent=5 // pred_check
        %p1445 = pneg %p1444
      $region70: #{teacher_net_forward.1} parent=5 // pred_check_branch
        %1447 = sbr.rel (%p1445) target = $region72
      $region71: #{teacher_net_forward.1} parent=5 // pred_region
        %s1448 = ssub.s32 %s24, 2
        // Predicated region
        $region73: #{teacher_net_forward.1} parent=71 // pred_check
          %p1449 = pneg %p247
        $region74: #{teacher_net_forward.1} parent=71 // pred_check_branch
          %1451 = sbr.rel (%p1449) target = $region76
        $region75: #{teacher_net_forward.1} parent=71 // pred_region
          %p1452 = scmp.lt.s32.totalorder %s30, 1
          %s1453 = scalar_select %p1452, %s30, 1
          %s1454 = smul.addr %s1453, 8
          %s1455 = smul.addr %s1454, 8
          %s1456 = scalar_lea.vmem %s9, %s1455
        $region76: #{teacher_net_forward.1} parent=71 // pred_fallthru
          _
        // Predicated region
        $region77: #{teacher_net_forward.1} parent=71 // pred_check
          %p1457 = pneg %p273
        $region78: #{teacher_net_forward.1} parent=71 // pred_check_branch
          %1459 = sbr.rel (%p1457) target = $region80
        $region79: #{teacher_net_forward.1} parent=71 // pred_region
          %s1460 = sand.u32 %s258, 1
          %s1461 = scalar_lea.sflag [#allocation3], %s1460
          %s1462 = sand.u32 %s258, 1
          %s1463 = smul.addr %s1462, 16
          %s1464 = scalar_lea.vmem [#allocation2], %s1463
          %1466 = dma.done %s1461, 256
        $region80: #{teacher_net_forward.1} parent=71 // pred_fallthru
          _
        // Predicated region
        $region81: #{teacher_net_forward.1} parent=71 // pred_check
          %p1467 = pneg %p299
        $region82: #{teacher_net_forward.1} parent=71 // pred_check_branch
          %1469 = sbr.rel (%p1467) target = $region84
        $region83: #{teacher_net_forward.1} parent=71 // pred_region
          %s1470 = sand.u32 %s284, 1
          %s1471 = scalar_lea.sflag [#allocation5], %s1470
          %s1472 = sand.u32 %s284, 1
          %s1473 = smul.addr %s1472, 4
          %s1474 = scalar_lea.vmem [#allocation4], %s1473
          %1476 = dma.done %s1471, 64
        $region84: #{teacher_net_forward.1} parent=71 // pred_fallthru
          _
      $region72: #{teacher_net_forward.1} parent=5 // pred_fallthru
        _
    $region6: #{teacher_net_forward.1} parent=1 // loop_footer
      %s28 = sadd.s32 1, %s24
    $region7: #{teacher_net_forward.1} parent=1 // loop_footer_branch
      %23 = sbr.rel target = $region3
    $region8: #{teacher_net_forward.1} parent=1 // loop_exit
      _
    %1477 = vsyncpa [#allocation3], 1
    %s1478 = scalar_lea.sflag [#allocation3], 1
    %1479 = vsyncpa %s1478, 1
    %1480 = vsyncpa [#allocation5], 1
    %s1481 = scalar_lea.sflag [#allocation5], 1
    %1482 = vsyncpa %s1481, 1

</llo_original>
